<compile_context>
chip_gen: v7x
topology: tpu7x:2x2x1
jax: 0.10.0
libtpu: 0.0.40
codegen_flags: <defaults>
</compile_context>

<pallas_src>
import functools

import jax
import jax.numpy as jnp
from jax import lax
from jax.experimental import pallas as pl
from jax.experimental.pallas import tpu as pltpu


def _ra_layer_kernel(x_ref, rel_ref, wqk_ref, wv_ref, bv_ref, wt_ref, bt_ref,
                     out_ref, *, compute_dtype):
    """One batch element: x (C, N), rel (N, N) -> out (C, N)."""
    cdt = compute_dtype

    x = x_ref[0]          # (C, N)  compute dtype
    rel = rel_ref[0]      # (N, N)  fp32

    # Shared q/k projection (q_conv.weight is k_conv.weight in the module).
    qk = jnp.dot(wqk_ref[...], x, preferred_element_type=jnp.float32)  # (Cq, N)
    qk_c = qk.astype(cdt)

    # energy[m, n] = sum_q qk[q, m] * qk[q, n]   (== x_q @ x_k in torch)
    energy = lax.dot_general(
        qk_c, qk_c, (((0,), (0,)), ((), ())),
        preferred_element_type=jnp.float32)                            # (N, N)

    # softmax over the last dim, in fp32 (row-wise reciprocal, then multiply).
    logits = energy + rel
    logits = logits - jnp.max(logits, axis=-1, keepdims=True)
    e = jnp.exp(logits)
    inv_row = 1.0 / jnp.sum(e, axis=-1, keepdims=True)                 # (N, 1)
    attn = e * inv_row
    # torch: attention / (1e-9 + attention.sum(dim=1, keepdim=True))
    inv_col = 1.0 / (1e-9 + jnp.sum(attn, axis=0, keepdims=True))      # (1, N)
    attn = attn * inv_col
    attn_c = attn.astype(cdt)

    # v projection and attention application.
    xv = jnp.dot(wv_ref[...], x, preferred_element_type=jnp.float32) + bv_ref[...]   # (C, N)
    x_r = jnp.dot(xv.astype(cdt), attn_c, preferred_element_type=jnp.float32)        # (C, N)

    # trans_conv(x - x_r) with BatchNorm1d's eval affine pre-folded into
    # (wt, bt) in the wrapper, then ReLU and residual add.
    x_f32 = x.astype(jnp.float32)
    diff = (x_f32 - x_r).astype(cdt)
    t = jnp.dot(wt_ref[...], diff, preferred_element_type=jnp.float32) + bt_ref[...]
    t = jnp.maximum(t, 0.0)

    out_ref[0] = (x_f32 + t).astype(out_ref.dtype)


def ra_layer_pallas(x, rel_pos_emb, params, *, compute_dtype=jnp.float32,
                    bn_eps=1e-5):
    """Forward pass of RA_Layer.

    x:            (B, C, N) fp32, NCL layout (same as PyTorch).
    rel_pos_emb:  (B, N, N) fp32.
    params:       dict with w_qk (C/4, C), w_v (C, C), b_v (C,), w_t (C, C),
                  b_t (C,), gamma/beta/running_mean/running_var (C,).
    returns:      (B, C, N) fp32.
    """
    B, C, N = x.shape
    Cq = params["w_qk"].shape[0]
    cdt = compute_dtype

    # Fold eval-mode BatchNorm1d into trans_conv (per output channel = rows
    # of w_t):  bn(w_t @ d + b_t) = (s*w_t) @ d + (s*b_t + shift).
    bn_scale = params["gamma"] / jnp.sqrt(params["running_var"] + bn_eps)   # (C,)
    bn_shift = params["beta"] - params["running_mean"] * bn_scale           # (C,)
    w_t_eff = params["w_t"] * bn_scale[:, None]
    b_t_eff = params["b_t"] * bn_scale + bn_shift

    # Cast the MXU operands once, in the wrapper (not per grid step).
    x_c = x.astype(cdt)
    w_qk = params["w_qk"].astype(cdt)
    w_v = params["w_v"].astype(cdt)
    w_t = w_t_eff.astype(cdt)
    b_v = params["b_v"].reshape(C, 1).astype(jnp.float32)
    b_t = b_t_eff.reshape(C, 1).astype(jnp.float32)
    rel = rel_pos_emb.astype(jnp.float32)

    kernel = functools.partial(_ra_layer_kernel, compute_dtype=cdt)

    return pl.pallas_call(
        kernel,
        out_shape=jax.ShapeDtypeStruct((B, C, N), jnp.float32),
        grid_spec=pltpu.PrefetchScalarGridSpec(
            num_scalar_prefetch=0,
            grid=(B,),
            in_specs=[
                pl.BlockSpec((1, C, N), lambda b: (b, 0, 0)),   # x
                pl.BlockSpec((1, N, N), lambda b: (b, 0, 0)),   # rel_pos_emb
                pl.BlockSpec((Cq, C),   lambda b: (0, 0)),      # W_qk (shared q/k)
                pl.BlockSpec((C, C),    lambda b: (0, 0)),      # W_v
                pl.BlockSpec((C, 1),    lambda b: (0, 0)),      # b_v
                pl.BlockSpec((C, C),    lambda b: (0, 0)),      # W_t (BN-folded)
                pl.BlockSpec((C, 1),    lambda b: (0, 0)),      # b_t (BN-folded)
            ],
            out_specs=pl.BlockSpec((1, C, N), lambda b: (b, 0, 0)),
        ),
        compiler_params=pltpu.CompilerParams(
            dimension_semantics=("parallel",),
        ),
    )(x_c, rel, w_qk, w_v, b_v, w_t, b_t)


def ra_layer_reference(x, rel_pos_emb, params, bn_eps=1e-5):
    """Pure-JAX fp32 reference matching the PyTorch forward (eval-mode BN)."""
    P = lax.Precision.HIGHEST
    w_qk, w_v, w_t = params["w_qk"], params["w_v"], params["w_t"]
    b_v, b_t = params["b_v"], params["b_t"]

    xqk = jnp.einsum("qc,bcn->bqn", w_qk, x, precision=P)            # (B, Cq, N)
    energy = jnp.einsum("bqm,bqn->bmn", xqk, xqk, precision=P)       # (B, N, N)
    attn = jax.nn.softmax(energy + rel_pos_emb, axis=-1)
    attn = attn / (1e-9 + attn.sum(axis=1, keepdims=True))

    xv = jnp.einsum("dc,bcn->bdn", w_v, x, precision=P) + b_v[None, :, None]
    x_r = jnp.einsum("bcm,bmn->bcn", xv, attn, precision=P)          # (B, C, N)

    t = jnp.einsum("dc,bcn->bdn", w_t, x - x_r, precision=P) + b_t[None, :, None]
    t = (t - params["running_mean"][None, :, None]) / jnp.sqrt(
        params["running_var"][None, :, None] + bn_eps)
    t = t * params["gamma"][None, :, None] + params["beta"][None, :, None]
    return x + jnp.maximum(t, 0.0)


def init_params(key, channels):
    """Deterministic init mirroring the module's parameter shapes."""
    cq = channels // 4
    ks = jax.random.split(key, 9)
    bnd = 1.0 / jnp.sqrt(channels)
    return {
        "w_qk": jax.random.uniform(ks[0], (cq, channels), jnp.float32, -bnd, bnd),
        "w_v": jax.random.uniform(ks[1], (channels, channels), jnp.float32, -bnd, bnd),
        "b_v": jax.random.uniform(ks[2], (channels,), jnp.float32, -bnd, bnd),
        "w_t": jax.random.uniform(ks[3], (channels, channels), jnp.float32, -bnd, bnd),
        "b_t": jax.random.uniform(ks[4], (channels,), jnp.float32, -bnd, bnd),
        "gamma": jax.random.uniform(ks[5], (channels,), jnp.float32, 0.5, 1.5),
        "beta": jax.random.uniform(ks[6], (channels,), jnp.float32, -0.5, 0.5),
        "running_mean": 0.1 * jax.random.normal(ks[7], (channels,), jnp.float32),
        "running_var": jax.random.uniform(ks[8], (channels,), jnp.float32, 0.5, 1.5),
    }


if __name__ == "__main__":
    key = jax.random.PRNGKey(0)

    # Small but lane-dense shapes: channels=64 (-> Cq=16), N=128 points.
    B, C, N = 2, 64, 128
    key, kx, kr, kp = jax.random.split(key, 4)
    x = jax.random.normal(kx, (B, C, N), dtype=jnp.float32)
    rel_pos_emb = jax.random.normal(kr, (B, N, N), dtype=jnp.float32)
    params = init_params(kp, C)

    # fp32 path (default): tight check against the reference.
    y = jax.block_until_ready(ra_layer_pallas(x, rel_pos_emb, params))
    y_ref = ra_layer_reference(x, rel_pos_emb, params)
    assert y.shape == (B, C, N), y.shape
    assert jnp.allclose(y, y_ref, rtol=1e-3, atol=1e-3), "mismatch vs reference"

    # bf16 MXU path (v6e/v7x bandwidth win): fp32 accumulation, loose check.
    y_bf16 = jax.block_until_ready(
        ra_layer_pallas(x, rel_pos_emb, params, compute_dtype=jnp.bfloat16))
    assert y_bf16.shape == (B, C, N)
    assert bool(jnp.all(jnp.isfinite(y_bf16)))
    assert float(jnp.mean(jnp.abs(y_bf16 - y_ref))) < 0.15, "bf16 path diverged"

    print("KERNEL_OK")
</pallas_src>

<mosaic_0001>
module attributes {stable_mosaic.version = 11 : i64} {
  func.func @_ra_layer_kernel(%arg0: i32, %arg1: memref<1x64x128xf32, #tpu.memory_space<vmem>>, %arg2: memref<1x128x128xf32, #tpu.memory_space<vmem>>, %arg3: memref<16x64xf32, #tpu.memory_space<vmem>>, %arg4: memref<64x64xf32, #tpu.memory_space<vmem>>, %arg5: memref<64x1xf32, #tpu.memory_space<vmem>>, %arg6: memref<64x64xf32, #tpu.memory_space<vmem>>, %arg7: memref<64x1xf32, #tpu.memory_space<vmem>>, %arg8: memref<1x64x128xf32, #tpu.memory_space<vmem>>) attributes {dimension_semantics = [#tpu.dimension_semantics<parallel>], iteration_bounds = array<i64: 2>, scalar_prefetch = 0 : i64, scratch_operands = 0 : i64, tpu.core_type = #tpu.core_type<tc>, window_params = [{transform_indices = @transform_0, window_bounds = array<i64: 1, 64, 128>}, {transform_indices = @transform_1, window_bounds = array<i64: 1, 128, 128>}, {pipeline_mode = #tpu.pipeline_mode<synchronous>, transform_indices = @transform_2, window_bounds = array<i64: 16, 64>}, {pipeline_mode = #tpu.pipeline_mode<synchronous>, transform_indices = @transform_3, window_bounds = array<i64: 64, 64>}, {pipeline_mode = #tpu.pipeline_mode<synchronous>, transform_indices = @transform_4, window_bounds = array<i64: 64, 1>}, {pipeline_mode = #tpu.pipeline_mode<synchronous>, transform_indices = @transform_5, window_bounds = array<i64: 64, 64>}, {pipeline_mode = #tpu.pipeline_mode<synchronous>, transform_indices = @transform_6, window_bounds = array<i64: 64, 1>}, {transform_indices = @transform_7, window_bounds = array<i64: 1, 64, 128>}]} {
    %c0 = arith.constant 0 : index
    %c0_0 = arith.constant 0 : index
    %c0_1 = arith.constant 0 : index
    %0 = vector.load %arg1[%c0, %c0_0, %c0_1] : memref<1x64x128xf32, #tpu.memory_space<vmem>>, vector<1x64x128xf32>
    %1 = vector.shape_cast %0 : vector<1x64x128xf32> to vector<64x128xf32>
    %c0_2 = arith.constant 0 : index
    %c0_3 = arith.constant 0 : index
    %c0_4 = arith.constant 0 : index
    %2 = vector.load %arg2[%c0_2, %c0_3, %c0_4] : memref<1x128x128xf32, #tpu.memory_space<vmem>>, vector<1x128x128xf32>
    %3 = vector.shape_cast %2 : vector<1x128x128xf32> to vector<128x128xf32>
    %c0_5 = arith.constant 0 : index
    %c0_6 = arith.constant 0 : index
    %4 = vector.load %arg3[%c0_5, %c0_6] : memref<16x64xf32, #tpu.memory_space<vmem>>, vector<16x64xf32>
    %cst = arith.constant dense<0.000000e+00> : vector<16x128xf32>
    %5 = tpu.matmul %4, %1, %cst {dimension_numbers = #tpu.dot_dimension_numbers<[1], [0], [0], [1], [0, 0, 1, 1], [], []>} : vector<16x64xf32>, vector<64x128xf32>, vector<16x128xf32> -> vector<16x128xf32>
    %cst_7 = arith.constant dense<0.000000e+00> : vector<128x128xf32>
    %6 = tpu.matmul %5, %5, %cst_7 {dimension_numbers = #tpu.dot_dimension_numbers<[0], [0], [1], [1], [0, 1, 1, 1], [], []>} : vector<16x128xf32>, vector<16x128xf32>, vector<128x128xf32> -> vector<128x128xf32>
    %7 = arith.addf %6, %3 : vector<128x128xf32>
    %cst_8 = arith.constant dense<0xFF800000> : vector<128xf32>
    %8 = vector.multi_reduction <maximumf>, %7, %cst_8 [1] : vector<128x128xf32> to vector<128xf32>
    %9 = vector.shape_cast %8 : vector<128xf32> to vector<128x1xf32>
    %10 = vector.broadcast %9 : vector<128x1xf32> to vector<128x128xf32>
    %11 = arith.subf %7, %10 : vector<128x128xf32>
    %12 = math.exp %11 : vector<128x128xf32>
    %cst_9 = arith.constant dense<0.000000e+00> : vector<128xf32>
    %13 = vector.multi_reduction <add>, %12, %cst_9 [1] : vector<128x128xf32> to vector<128xf32>
    %14 = vector.shape_cast %13 : vector<128xf32> to vector<128x1xf32>
    %cst_10 = arith.constant 1.000000e+00 : f32
    %15 = vector.broadcast %cst_10 : f32 to vector<128x1xf32>
    %16 = arith.divf %15, %14 : vector<128x1xf32>
    %17 = vector.broadcast %16 : vector<128x1xf32> to vector<128x128xf32>
    %18 = arith.mulf %12, %17 : vector<128x128xf32>
    %cst_11 = arith.constant dense<0.000000e+00> : vector<128xf32>
    %19 = vector.multi_reduction <add>, %18, %cst_11 [0] : vector<128x128xf32> to vector<128xf32>
    %20 = vector.shape_cast %19 : vector<128xf32> to vector<1x128xf32>
    %cst_12 = arith.constant 9.99999971E-10 : f32
    %21 = vector.broadcast %cst_12 : f32 to vector<1x128xf32>
    %22 = arith.addf %21, %20 : vector<1x128xf32>
    %cst_13 = arith.constant 1.000000e+00 : f32
    %23 = vector.broadcast %cst_13 : f32 to vector<1x128xf32>
    %24 = arith.divf %23, %22 : vector<1x128xf32>
    %25 = vector.broadcast %24 : vector<1x128xf32> to vector<128x128xf32>
    %26 = arith.mulf %18, %25 : vector<128x128xf32>
    %c0_14 = arith.constant 0 : index
    %c0_15 = arith.constant 0 : index
    %27 = vector.load %arg4[%c0_14, %c0_15] : memref<64x64xf32, #tpu.memory_space<vmem>>, vector<64x64xf32>
    %cst_16 = arith.constant dense<0.000000e+00> : vector<64x128xf32>
    %28 = tpu.matmul %27, %1, %cst_16 {dimension_numbers = #tpu.dot_dimension_numbers<[1], [0], [0], [1], [0, 0, 1, 1], [], []>} : vector<64x64xf32>, vector<64x128xf32>, vector<64x128xf32> -> vector<64x128xf32>
    %c0_17 = arith.constant 0 : index
    %c0_18 = arith.constant 0 : index
    %29 = vector.load %arg5[%c0_17, %c0_18] : memref<64x1xf32, #tpu.memory_space<vmem>>, vector<64x1xf32>
    %30 = vector.broadcast %29 : vector<64x1xf32> to vector<64x128xf32>
    %31 = arith.addf %28, %30 : vector<64x128xf32>
    %cst_19 = arith.constant dense<0.000000e+00> : vector<64x128xf32>
    %32 = tpu.matmul %31, %26, %cst_19 {dimension_numbers = #tpu.dot_dimension_numbers<[1], [0], [0], [1], [0, 0, 1, 1], [], []>} : vector<64x128xf32>, vector<128x128xf32>, vector<64x128xf32> -> vector<64x128xf32>
    %33 = arith.subf %1, %32 : vector<64x128xf32>
    %c0_20 = arith.constant 0 : index
    %c0_21 = arith.constant 0 : index
    %34 = vector.load %arg6[%c0_20, %c0_21] : memref<64x64xf32, #tpu.memory_space<vmem>>, vector<64x64xf32>
    %cst_22 = arith.constant dense<0.000000e+00> : vector<64x128xf32>
    %35 = tpu.matmul %34, %33, %cst_22 {dimension_numbers = #tpu.dot_dimension_numbers<[1], [0], [0], [1], [0, 0, 1, 1], [], []>} : vector<64x64xf32>, vector<64x128xf32>, vector<64x128xf32> -> vector<64x128xf32>
    %c0_23 = arith.constant 0 : index
    %c0_24 = arith.constant 0 : index
    %36 = vector.load %arg7[%c0_23, %c0_24] : memref<64x1xf32, #tpu.memory_space<vmem>>, vector<64x1xf32>
    %37 = vector.broadcast %36 : vector<64x1xf32> to vector<64x128xf32>
    %38 = arith.addf %35, %37 : vector<64x128xf32>
    %cst_25 = arith.constant 0.000000e+00 : f32
    %39 = vector.broadcast %cst_25 : f32 to vector<64x128xf32>
    %40 = arith.maximumf %38, %39 : vector<64x128xf32>
    %41 = arith.addf %1, %40 : vector<64x128xf32>
    %c0_26 = arith.constant 0 : index
    %c0_27 = arith.constant 0 : index
    %c0_28 = arith.constant 0 : index
    %42 = vector.load %arg8[%c0_26, %c0_27, %c0_28] : memref<1x64x128xf32, #tpu.memory_space<vmem>>, vector<1x64x128xf32>
    %43 = vector.shape_cast %42 : vector<1x64x128xf32> to vector<64x128xf32>
    %44 = vector.shape_cast %41 : vector<64x128xf32> to vector<1x64x128xf32>
    tpu.vector_store %arg8[%c0_26, %c0_27, %c0_28], %44 {strides = array<i32>} : memref<1x64x128xf32, #tpu.memory_space<vmem>>, vector<1x64x128xf32>,
    return
  }
  func.func @transform_0(%arg0: i32) -> (i32, i32, i32) {
    %c0_i32 = arith.constant 0 : i32
    %c0_i32_0 = arith.constant 0 : i32
    %c0_i32_1 = arith.constant 0 : i32
    return %arg0, %c0_i32, %c0_i32_0 : i32, i32, i32
  }
  func.func @transform_1(%arg0: i32) -> (i32, i32, i32) {
    %c0_i32 = arith.constant 0 : i32
    %c0_i32_0 = arith.constant 0 : i32
    %c0_i32_1 = arith.constant 0 : i32
    return %arg0, %c0_i32, %c0_i32_0 : i32, i32, i32
  }
  func.func @transform_2(%arg0: i32) -> (i32, i32) {
    %c0_i32 = arith.constant 0 : i32
    %c0_i32_0 = arith.constant 0 : i32
    %c0_i32_1 = arith.constant 0 : i32
    return %c0_i32, %c0_i32_0 : i32, i32
  }
  func.func @transform_3(%arg0: i32) -> (i32, i32) {
    %c0_i32 = arith.constant 0 : i32
    %c0_i32_0 = arith.constant 0 : i32
    %c0_i32_1 = arith.constant 0 : i32
    return %c0_i32, %c0_i32_0 : i32, i32
  }
  func.func @transform_4(%arg0: i32) -> (i32, i32) {
    %c0_i32 = arith.constant 0 : i32
    %c0_i32_0 = arith.constant 0 : i32
    %c0_i32_1 = arith.constant 0 : i32
    return %c0_i32, %c0_i32_0 : i32, i32
  }
  func.func @transform_5(%arg0: i32) -> (i32, i32) {
    %c0_i32 = arith.constant 0 : i32
    %c0_i32_0 = arith.constant 0 : i32
    %c0_i32_1 = arith.constant 0 : i32
    return %c0_i32, %c0_i32_0 : i32, i32
  }
  func.func @transform_6(%arg0: i32) -> (i32, i32) {
    %c0_i32 = arith.constant 0 : i32
    %c0_i32_0 = arith.constant 0 : i32
    %c0_i32_1 = arith.constant 0 : i32
    return %c0_i32, %c0_i32_0 : i32, i32
  }
  func.func @transform_7(%arg0: i32) -> (i32, i32, i32) {
    %c0_i32 = arith.constant 0 : i32
    %c0_i32_0 = arith.constant 0 : i32
    %c0_i32_1 = arith.constant 0 : i32
    return %arg0, %c0_i32, %c0_i32_0 : i32, i32, i32
  }
}

</mosaic_0001>

<llo_original>
// kernel: tpu_custom_call.1
$region0: #{tpu_custom_call.1}
  #allocation0 [shape = 'u32[]', space=smem, size = 0x4, offset = 0x4, fixed_abs, tag = 'smem constant byte address 0x4 - core index']
  #allocation1 [shape = 'u32[144,128]{1,0:T(1,128)}', space=vmem, size = 0x12000, scoped, tag = 'internal scratch']
  %s0 = inlined_call_operand.vmem [shape: f32[2,64,128], index: 0, kind: input, shape index: {}]
  %s1 = inlined_call_operand.hbm [shape: f32[2,128,128], index: 1, kind: input, shape index: {}]
  %s2 = inlined_call_operand.hbm [shape: f32[16,64], index: 2, kind: input, shape index: {}]
  %s3 = inlined_call_operand.hbm [shape: f32[64,64], index: 3, kind: input, shape index: {}]
  %s4 = inlined_call_operand.vmem [shape: f32[64,1], index: 4, kind: input, shape index: {}]
  %s5 = inlined_call_operand.hbm [shape: f32[64,64], index: 5, kind: input, shape index: {}]
  %s6 = inlined_call_operand.vmem [shape: f32[64,1], index: 6, kind: input, shape index: {}]
  %s7 = inlined_call_operand.hbm [shape: f32[2,64,128], index: 7, kind: output, shape index: {}]
  %s8 = sld [smem:[#allocation0]]
  $region77: #{tpu_custom_call.1} parent=0
    _
  %s10 = ssub.s32 1, %s8
  %s11 = scalar_select 0, %s10, %s8
  $region1: #{tpu_custom_call.1} parent=0
    #allocation2 [shape = 'u8[131072]{0}', space=vmem, size = 0x20000, scoped, tag = 'input window, operand 1']
    #allocation3 [shape = 's32[2]{0}', space=sflag, size = 0x8, scoped, tag = 'scoped memory for tpu_custom_call.1']
    #allocation4 [shape = 's32[2]{0}', space=sflag, size = 0x8, scoped, tag = 'scoped memory for tpu_custom_call.1']
    #allocation5 [shape = 'u8[8192]{0}', space=vmem, size = 0x2000, scoped, tag = 'input window, operand 2, single buffered']
    #allocation6 [shape = 's32[1]{0}', space=sflag, size = 0x4, scoped, tag = 'scoped memory for tpu_custom_call.1']
    #allocation7 [shape = 'u8[32768]{0}', space=vmem, size = 0x8000, scoped, tag = 'input window, operand 3, single buffered']
    #allocation8 [shape = 'u8[32768]{0}', space=vmem, size = 0x8000, scoped, tag = 'input window, operand 5, single buffered']
    #allocation9 [shape = 's32[1]{0}', space=sflag, size = 0x4, scoped, tag = 'scoped memory for tpu_custom_call.1']
    #allocation10 [shape = 'u8[65536]{0}', space=vmem, size = 0x10000, scoped, tag = 'output window, operand 0']
    %12 = vsyncpa [#allocation3], 0
    %s13 = scalar_lea.sflag [#allocation3], 1
    %14 = vsyncpa %s13, 0
    %15 = vsyncpa [#allocation6], 0
    %16 = vsyncpa [#allocation9], 0
    %17 = vsyncpa [#allocation4], 0
    %s18 = scalar_lea.sflag [#allocation4], 1
    %19 = vsyncpa %s18, 0
    loop: start=0, step=1, limit=4
    $region2: #{tpu_custom_call.1} parent=1 // loop_pre_header
      _
    $region3: #{tpu_custom_call.1} parent=1 // loop_header
      %s21 = sphi 0, %s25
      %p22 = scmp.ge.s32.totalorder %s21, 4
      %s31 = sphi 0, %s33
      %s34 = sphi 0, %s31
      %s35 = sphi 0, %s34
      %s51 = sphi 0, %s35
      %s57 = sphi 0, %s59
      %s60 = sphi 0, %s57
      %s61 = sphi 0, %s60
      %s77 = sphi 0, %s61
      %s81 = sphi 0, %s81
      %s83 = sphi 0, %s81
      %s84 = sphi 0, %s83
      %s98 = sphi 0, %s84
      %s102 = sphi 0, %s102
      %s104 = sphi 0, %s102
      %s105 = sphi 0, %s104
      %s119 = sphi 0, %s105
      %s123 = sphi 0, %s123
      %s125 = sphi 0, %s123
      %s126 = sphi 0, %s125
      %s140 = sphi 0, %s126
      %s144 = sphi 0, %s144
      %s146 = sphi 0, %s144
      %s147 = sphi 0, %s146
      %s161 = sphi 0, %s147
      %s165 = sphi 0, %s165
      %s167 = sphi 0, %s165
      %s168 = sphi 0, %s167
      %s182 = sphi 0, %s168
      %s188 = sphi 0, %s190
      %s191 = sphi 0, %s188
      %s192 = sphi 0, %s191
      %s208 = sphi 0, %s192
    $region4: #{tpu_custom_call.1} parent=1 // loop_header_branch
      %24 = sbr.rel (%p22) target = $region8
    $region5: #{tpu_custom_call.1} parent=1 // loop_body
      %s26 = ssub.s32 %s21, 1
      %s27 = ssub.s32 %s21, 2
      %s28 = sadd.s32 %s21, 1
      %s29 = ssub.s32 %s21, %s28
      %p30 = scmp.eq.s32.totalorder %s29, 0
      %s32 = sadd.s32 %s31, 1
      %s33 = scalar_select %p30, %s31, %s32
      %p36 = pneg %p30
      %p37 = scmp.eq.s32.totalorder %s21, 1
      %p38 = por %p36, %p37
      %p39 = scmp.ne.s32.totalorder %s31, %s34
      %p40 = scmp.eq.s32.totalorder %s21, 0
      %p41 = por %p39, %p40
      %p42 = scmp.ne.s32.totalorder %s31, %s34
      %p43 = scmp.eq.s32.totalorder %s26, 1
      %p44 = por %p42, %p43
      %p45 = scmp.ne.s32.totalorder %s34, %s35
      %p46 = scmp.eq.s32.totalorder %s26, 0
      %p47 = por %p45, %p46
      %p48 = scmp.ne.s32.totalorder %s34, %s35
      %p49 = scmp.eq.s32.totalorder %s27, 1
      %p50 = por %p48, %p49
      %p52 = scmp.ne.s32.totalorder %s35, %s51
      %p53 = scmp.eq.s32.totalorder %s27, 0
      %p54 = por %p52, %p53
      %s55 = ssub.s32 %s21, %s28
      %p56 = scmp.eq.s32.totalorder %s55, 0
      %s58 = sadd.s32 %s57, 1
      %s59 = scalar_select %p56, %s57, %s58
      %p62 = pneg %p56
      %p63 = scmp.eq.s32.totalorder %s21, 1
      %p64 = por %p62, %p63
      %p65 = scmp.ne.s32.totalorder %s57, %s60
      %p66 = scmp.eq.s32.totalorder %s21, 0
      %p67 = por %p65, %p66
      %p68 = scmp.ne.s32.totalorder %s57, %s60
      %p69 = scmp.eq.s32.totalorder %s26, 1
      %p70 = por %p68, %p69
      %p71 = scmp.ne.s32.totalorder %s60, %s61
      %p72 = scmp.eq.s32.totalorder %s26, 0
      %p73 = por %p71, %p72
      %p74 = scmp.ne.s32.totalorder %s60, %s61
      %p75 = scmp.eq.s32.totalorder %s27, 1
      %p76 = por %p74, %p75
      %p78 = scmp.ne.s32.totalorder %s61, %s77
      %p79 = scmp.eq.s32.totalorder %s27, 0
      %p80 = por %p78, %p79
      %s82 = sadd.s32 %s81, 1
      %p85 = scmp.eq.s32.totalorder %s21, 1
      %p86 = scmp.ne.s32.totalorder %s81, %s83
      %p87 = scmp.eq.s32.totalorder %s21, 0
      %p88 = por %p86, %p87
      %p89 = scmp.ne.s32.totalorder %s81, %s83
      %p90 = scmp.eq.s32.totalorder %s26, 1
      %p91 = por %p89, %p90
      %p92 = scmp.ne.s32.totalorder %s83, %s84
      %p93 = scmp.eq.s32.totalorder %s26, 0
      %p94 = por %p92, %p93
      %p95 = scmp.ne.s32.totalorder %s83, %s84
      %p96 = scmp.eq.s32.totalorder %s27, 1
      %p97 = por %p95, %p96
      %p99 = scmp.ne.s32.totalorder %s84, %s98
      %p100 = scmp.eq.s32.totalorder %s27, 0
      %p101 = por %p99, %p100
      %s103 = sadd.s32 %s102, 1
      %p106 = scmp.eq.s32.totalorder %s21, 1
      %p107 = scmp.ne.s32.totalorder %s102, %s104
      %p108 = scmp.eq.s32.totalorder %s21, 0
      %p109 = por %p107, %p108
      %p110 = scmp.ne.s32.totalorder %s102, %s104
      %p111 = scmp.eq.s32.totalorder %s26, 1
      %p112 = por %p110, %p111
      %p113 = scmp.ne.s32.totalorder %s104, %s105
      %p114 = scmp.eq.s32.totalorder %s26, 0
      %p115 = por %p113, %p114
      %p116 = scmp.ne.s32.totalorder %s104, %s105
      %p117 = scmp.eq.s32.totalorder %s27, 1
      %p118 = por %p116, %p117
      %p120 = scmp.ne.s32.totalorder %s105, %s119
      %p121 = scmp.eq.s32.totalorder %s27, 0
      %p122 = por %p120, %p121
      %s124 = sadd.s32 %s123, 1
      %p127 = scmp.eq.s32.totalorder %s21, 1
      %p128 = scmp.ne.s32.totalorder %s123, %s125
      %p129 = scmp.eq.s32.totalorder %s21, 0
      %p130 = por %p128, %p129
      %p131 = scmp.ne.s32.totalorder %s123, %s125
      %p132 = scmp.eq.s32.totalorder %s26, 1
      %p133 = por %p131, %p132
      %p134 = scmp.ne.s32.totalorder %s125, %s126
      %p135 = scmp.eq.s32.totalorder %s26, 0
      %p136 = por %p134, %p135
      %p137 = scmp.ne.s32.totalorder %s125, %s126
      %p138 = scmp.eq.s32.totalorder %s27, 1
      %p139 = por %p137, %p138
      %p141 = scmp.ne.s32.totalorder %s126, %s140
      %p142 = scmp.eq.s32.totalorder %s27, 0
      %p143 = por %p141, %p142
      %s145 = sadd.s32 %s144, 1
      %p148 = scmp.eq.s32.totalorder %s21, 1
      %p149 = scmp.ne.s32.totalorder %s144, %s146
      %p150 = scmp.eq.s32.totalorder %s21, 0
      %p151 = por %p149, %p150
      %p152 = scmp.ne.s32.totalorder %s144, %s146
      %p153 = scmp.eq.s32.totalorder %s26, 1
      %p154 = por %p152, %p153
      %p155 = scmp.ne.s32.totalorder %s146, %s147
      %p156 = scmp.eq.s32.totalorder %s26, 0
      %p157 = por %p155, %p156
      %p158 = scmp.ne.s32.totalorder %s146, %s147
      %p159 = scmp.eq.s32.totalorder %s27, 1
      %p160 = por %p158, %p159
      %p162 = scmp.ne.s32.totalorder %s147, %s161
      %p163 = scmp.eq.s32.totalorder %s27, 0
      %p164 = por %p162, %p163
      %s166 = sadd.s32 %s165, 1
      %p169 = scmp.eq.s32.totalorder %s21, 1
      %p170 = scmp.ne.s32.totalorder %s165, %s167
      %p171 = scmp.eq.s32.totalorder %s21, 0
      %p172 = por %p170, %p171
      %p173 = scmp.ne.s32.totalorder %s165, %s167
      %p174 = scmp.eq.s32.totalorder %s26, 1
      %p175 = por %p173, %p174
      %p176 = scmp.ne.s32.totalorder %s167, %s168
      %p177 = scmp.eq.s32.totalorder %s26, 0
      %p178 = por %p176, %p177
      %p179 = scmp.ne.s32.totalorder %s167, %s168
      %p180 = scmp.eq.s32.totalorder %s27, 1
      %p181 = por %p179, %p180
      %p183 = scmp.ne.s32.totalorder %s168, %s182
      %p184 = scmp.eq.s32.totalorder %s27, 0
      %p185 = por %p183, %p184
      %s186 = ssub.s32 %s21, %s28
      %p187 = scmp.eq.s32.totalorder %s186, 0
      %s189 = sadd.s32 %s188, 1
      %s190 = scalar_select %p187, %s188, %s189
      %p193 = pneg %p187
      %p194 = scmp.eq.s32.totalorder %s21, 1
      %p195 = por %p193, %p194
      %p196 = scmp.ne.s32.totalorder %s188, %s191
      %p197 = scmp.eq.s32.totalorder %s21, 0
      %p198 = por %p196, %p197
      %p199 = scmp.ne.s32.totalorder %s188, %s191
      %p200 = scmp.eq.s32.totalorder %s26, 1
      %p201 = por %p199, %p200
      %p202 = scmp.ne.s32.totalorder %s191, %s192
      %p203 = scmp.eq.s32.totalorder %s26, 0
      %p204 = por %p202, %p203
      %p205 = scmp.ne.s32.totalorder %s191, %s192
      %p206 = scmp.eq.s32.totalorder %s27, 1
      %p207 = por %p205, %p206
      %p209 = scmp.ne.s32.totalorder %s192, %s208
      %p210 = scmp.eq.s32.totalorder %s27, 0
      %p211 = por %p209, %p210
      %p212 = scmp.le.s32.totalorder 1, %s21
      %p213 = scmp.lt.s32.totalorder %s21, 3
      %p214 = pnand %p212, %p213
      %p215 = pneg %p214
      // Predicated region
      $region9: #{tpu_custom_call.1} parent=5 // pred_check
        _
      $region10: #{tpu_custom_call.1} parent=5 // pred_check_branch
        %217 = sbr.rel (%p214) target = $region12
      $region11: #{tpu_custom_call.1} parent=5 // pred_region
        %s218 = ssub.s32 %s21, 1
        // Predicated region
        $region13: #{tpu_custom_call.1} parent=11 // pred_check
          %p219 = pneg %p94
        $region14: #{tpu_custom_call.1} parent=11 // pred_check_branch
          %221 = sbr.rel (%p219) target = $region16
        $region15: #{tpu_custom_call.1} parent=11 // pred_region
          %s223 = ssub.s32 256, 256
          %224 = vsyncadd [#allocation6], %s223
          %s225 = sshll.u32 [#allocation5], 4
          %s226 = int_to_ptr.vmem [resolvable:$true] %s225
          %231 = dma.hbm_to_vmem [thread:$0]  %s2, 256, %s226, [#allocation6], 128, 128, 8
        $region16: #{tpu_custom_call.1} parent=11 // pred_fallthru
          _
        // Predicated region
        $region17: #{tpu_custom_call.1} parent=11 // pred_check
          %p232 = pneg %p115
        $region18: #{tpu_custom_call.1} parent=11 // pred_check_branch
          %234 = sbr.rel (%p232) target = $region20
        $region19: #{tpu_custom_call.1} parent=11 // pred_region
          %s236 = ssub.s32 1024, 1024
          %237 = vsyncadd [#allocation6], %s236
          %s238 = sshll.u32 [#allocation7], 4
          %s239 = int_to_ptr.vmem [resolvable:$true] %s238
          %244 = dma.hbm_to_vmem [thread:$0]  %s3, 1024, %s239, [#allocation6], 128, 128, 8
        $region20: #{tpu_custom_call.1} parent=11 // pred_fallthru
          _
        // Predicated region
        $region21: #{tpu_custom_call.1} parent=11 // pred_check
          %p245 = pneg %p136
        $region22: #{tpu_custom_call.1} parent=11 // pred_check_branch
          %247 = sbr.rel (%p245) target = $region24
        $region23: #{tpu_custom_call.1} parent=11 // pred_region
          _
        $region24: #{tpu_custom_call.1} parent=11 // pred_fallthru
          _
        // Predicated region
        $region25: #{tpu_custom_call.1} parent=11 // pred_check
          %p248 = pneg %p157
        $region26: #{tpu_custom_call.1} parent=11 // pred_check_branch
          %250 = sbr.rel (%p248) target = $region28
        $region27: #{tpu_custom_call.1} parent=11 // pred_region
          %s252 = ssub.s32 1024, 1024
          %253 = vsyncadd [#allocation9], %s252
          %s254 = sshll.u32 [#allocation8], 4
          %s255 = int_to_ptr.vmem [resolvable:$true] %s254
          %260 = dma.hbm_to_vmem [thread:$0]  %s5, 1024, %s255, [#allocation9], 128, 128, 8
        $region28: #{tpu_custom_call.1} parent=11 // pred_fallthru
          _
        // Predicated region
        $region29: #{tpu_custom_call.1} parent=11 // pred_check
          %p261 = pneg %p178
        $region30: #{tpu_custom_call.1} parent=11 // pred_check_branch
          %263 = sbr.rel (%p261) target = $region32
        $region31: #{tpu_custom_call.1} parent=11 // pred_region
          _
        $region32: #{tpu_custom_call.1} parent=11 // pred_fallthru
          _
      $region12: #{tpu_custom_call.1} parent=5 // pred_fallthru
        _
      %p264 = scmp.lt.s32.totalorder %s21, 2
      // Predicated region
      $region33: #{tpu_custom_call.1} parent=5 // pred_check
        %p265 = pneg %p264
      $region34: #{tpu_custom_call.1} parent=5 // pred_check_branch
        %267 = sbr.rel (%p265) target = $region36
      $region35: #{tpu_custom_call.1} parent=5 // pred_region
        // Predicated region
        $region37: #{tpu_custom_call.1} parent=35 // pred_check
          %p268 = pneg %p41
        $region38: #{tpu_custom_call.1} parent=35 // pred_check_branch
          %270 = sbr.rel (%p268) target = $region40
        $region39: #{tpu_custom_call.1} parent=35 // pred_region
          %p271 = scmp.lt.s32.totalorder %s21, 1
          %s272 = scalar_select %p271, %s21, 1
          %s273 = smul.addr %s272, 8
          %s274 = smul.addr %s273, 8
          %s275 = scalar_lea.vmem %s0, %s274
        $region40: #{tpu_custom_call.1} parent=35 // pred_fallthru
          _
        // Predicated region
        $region41: #{tpu_custom_call.1} parent=35 // pred_check
          %p276 = pneg %p67
        $region42: #{tpu_custom_call.1} parent=35 // pred_check_branch
          %278 = sbr.rel (%p276) target = $region44
        $region43: #{tpu_custom_call.1} parent=35 // pred_region
          %s279 = sand.u32 %s57, 1
          %s280 = scalar_lea.sflag [#allocation3], %s279
          %s281 = sand.u32 %s57, 1
          %s282 = smul.addr %s281, 128
          %s283 = scalar_lea.vmem [#allocation2], %s282
          %s285 = ssub.s32 2048, 2048
          %286 = vsyncadd %s280, %s285
          %s287 = smul.addr %s21, 16
          %s288 = smul.addr %s287, 128
          %s289 = scalar_lea.hbm %s1, %s288
          %s290 = sshll.u32 %s283, 4
          %s291 = int_to_ptr.vmem [resolvable:$true] %s290
          %296 = dma.hbm_to_vmem [thread:$0]  %s289, 2048, %s291, %s280, 128, 128, 8
        $region44: #{tpu_custom_call.1} parent=35 // pred_fallthru
          _
      $region36: #{tpu_custom_call.1} parent=5 // pred_fallthru
        _
      %p297 = scmp.le.s32.totalorder 1, %s21
      %p298 = scmp.lt.s32.totalorder %s21, 3
      %p299 = pnand %p297, %p298
      %p300 = pneg %p299
      // Predicated region
      $region45: #{tpu_custom_call.1} parent=5 // pred_check
        _
      $region46: #{tpu_custom_call.1} parent=5 // pred_check_branch
        %302 = sbr.rel (%p299) target = $region48
      $region47: #{tpu_custom_call.1} parent=5 // pred_region
        %s303 = ssub.s32 %s21, 1
        %s304 = sand.u32 %s60, 1
        %s305 = scalar_lea.sflag [#allocation3], %s304
        %s306 = sand.u32 %s60, 1
        %s307 = smul.addr %s306, 128
        %s308 = scalar_lea.vmem [#allocation2], %s307
        // Predicated region
        $region49: #{tpu_custom_call.1} parent=47 // pred_check
          %p309 = pneg %p73
        $region50: #{tpu_custom_call.1} parent=47 // pred_check_branch
          %311 = sbr.rel (%p309) target = $region52
        $region51: #{tpu_custom_call.1} parent=47 // pred_region
          %312 = dma.done %s305, 2048
        $region52: #{tpu_custom_call.1} parent=47 // pred_fallthru
          _
        // Predicated region
        $region53: #{tpu_custom_call.1} parent=47 // pred_check
          %p313 = pneg %p94
        $region54: #{tpu_custom_call.1} parent=47 // pred_check_branch
          %315 = sbr.rel (%p313) target = $region56
        $region55: #{tpu_custom_call.1} parent=47 // pred_region
          %316 = dma.done [#allocation6], 256
        $region56: #{tpu_custom_call.1} parent=47 // pred_fallthru
          _
        // Predicated region
        $region57: #{tpu_custom_call.1} parent=47 // pred_check
          %p317 = pneg %p115
        $region58: #{tpu_custom_call.1} parent=47 // pred_check_branch
          %319 = sbr.rel (%p317) target = $region60
        $region59: #{tpu_custom_call.1} parent=47 // pred_region
          %320 = dma.done [#allocation6], 1024
        $region60: #{tpu_custom_call.1} parent=47 // pred_fallthru
          _
        // Predicated region
        $region61: #{tpu_custom_call.1} parent=47 // pred_check
          %p321 = pneg %p157
        $region62: #{tpu_custom_call.1} parent=47 // pred_check_branch
          %323 = sbr.rel (%p321) target = $region64
        $region63: #{tpu_custom_call.1} parent=47 // pred_region
          %324 = dma.done [#allocation9], 1024
        $region64: #{tpu_custom_call.1} parent=47 // pred_fallthru
          _
        %p325 = scmp.lt.s32.totalorder %s26, 1
        %s326 = scalar_select %p325, %s26, 1
        %s327 = smul.addr %s326, 8
        %s328 = smul.addr %s327, 8
        %s329 = scalar_lea.vmem %s0, %s328
        %p330 = pneg %p47
        %p331 = pneg %p44
        %s332 = sand.u32 %s60, 1
        %s333 = scalar_lea.sflag [#allocation3], %s332
        %s334 = sand.u32 %s60, 1
        %s335 = smul.addr %s334, 128
        %s336 = scalar_lea.vmem [#allocation2], %s335
        %p337 = pneg %p73
        %p338 = pneg %p70
        %p339 = pneg %p94
        %p340 = pneg %p91
        %p341 = pneg %p115
        %p342 = pneg %p112
        %p343 = pneg %p136
        %p344 = pneg %p133
        %p345 = pneg %p157
        %p346 = pneg %p154
        %p347 = pneg %p178
        %p348 = pneg %p175
        %p349 = pneg %p204
        %p350 = pneg %p201
        %s351 = sand.u32 %s191, 1
        %s352 = scalar_lea.sflag [#allocation4], %s351
        %s353 = sand.u32 %s191, 1
        %s354 = smul.addr %s353, 64
        %s355 = scalar_lea.vmem [#allocation10], %s354
        %p356 = scmp.lt.s32.totalorder %s26, 1
        %s357 = scalar_select %p356, %s26, 1
        %s358 = smul.addr %s357, 8
        %s359 = smul.addr %s358, 8
        %s360 = scalar_lea.vmem %s0, %s359
        %v361 = vld [vmem:[%s360] sm:$0xff]
        %v362 = vld [vmem:[%s360 + $0x8] sm:$0xff]
        %v363 = vld [vmem:[%s360 + $0x10] sm:$0xff]
        %v364 = vld [vmem:[%s360 + $0x18] sm:$0xff]
        %v365 = vld [vmem:[%s360 + $0x20] sm:$0xff]
        %v366 = vld [vmem:[%s360 + $0x28] sm:$0xff]
        %v367 = vld [vmem:[%s360 + $0x30] sm:$0xff]
        %v368 = vld [vmem:[%s360 + $0x38] sm:$0xff]
        %v369 = vld [vmem:[%s308] sm:$0xff]
        %v370 = vld [vmem:[%s308 + $0x8] sm:$0xff]
        %v371 = vld [vmem:[%s308 + $0x10] sm:$0xff]
        %v372 = vld [vmem:[%s308 + $0x18] sm:$0xff]
        %v373 = vld [vmem:[%s308 + $0x20] sm:$0xff]
        %v374 = vld [vmem:[%s308 + $0x28] sm:$0xff]
        %v375 = vld [vmem:[%s308 + $0x30] sm:$0xff]
        %v376 = vld [vmem:[%s308 + $0x38] sm:$0xff]
        %v377 = vld [vmem:[%s308 + $0x40] sm:$0xff]
        %v378 = vld [vmem:[%s308 + $0x48] sm:$0xff]
        %v379 = vld [vmem:[%s308 + $0x50] sm:$0xff]
        %v380 = vld [vmem:[%s308 + $0x58] sm:$0xff]
        %v381 = vld [vmem:[%s308 + $0x60] sm:$0xff]
        %v382 = vld [vmem:[%s308 + $0x68] sm:$0xff]
        %v383 = vld [vmem:[%s308 + $0x70] sm:$0xff]
        %v384 = vld [vmem:[%s308 + $0x78] sm:$0xff]
        %v385 = vld [vmem:[#allocation5] sm:$0xff]
        %v386 = vld [vmem:[#allocation5 + $0x8] sm:$0xff]
        %vm387 = vcmask 523264
        %v389 = vsel %vm387, %v385, 0
        %v392 = vsel %vm387, %v386, 0
        %394 = vmatprep.subr.mxu0 0.0
        %395 = vmatpush1.msra.mxu0 %v361
        %396 = vmatprep.subr.mxu0 0.0
        %397 = vmatpush1.msra.mxu0 %v362
        %398 = vmatprep.subr.mxu0 0.0
        %399 = vmatpush1.msra.mxu0 %v363
        %400 = vmatprep.subr.mxu0 0.0
        %401 = vmatpush1.msra.mxu0 %v364
        %402 = vmatprep.subr.mxu0 0.0
        %403 = vmatpush1.msra.mxu0 %v365
        %404 = vmatprep.subr.mxu0 0.0
        %405 = vmatpush1.msra.mxu0 %v366
        %406 = vmatprep.subr.mxu0 0.0
        %407 = vmatpush1.msra.mxu0 %v367
        %408 = vmatprep.subr.mxu0 0.0
        %409 = vmatpush1.msra.mxu0 %v368
        %410 = vmatprep.subr.mxu0 0.0
        %411 = vmatpush1.msra.mxu0 0.0
        %412 = vmatprep.subr.mxu0 0.0
        %413 = vmatpush1.msra.mxu0 0.0
        %414 = vmatprep.subr.mxu0 0.0
        %415 = vmatpush1.msra.mxu0 0.0
        %416 = vmatprep.subr.mxu0 0.0
        %417 = vmatpush1.msra.mxu0 0.0
        %418 = vmatprep.subr.mxu0 0.0
        %419 = vmatpush1.msra.mxu0 0.0
        %420 = vmatprep.subr.mxu0 0.0
        %421 = vmatpush1.msra.mxu0 0.0
        %422 = vmatprep.subr.mxu0 0.0
        %423 = vmatpush1.msra.mxu0 0.0
        %424 = vmatprep.subr.mxu0 0.0
        %425 = vmatpush1.msra.mxu0 0.0
        %426 = vmatprep.subr.mxu0 0.0
        %427 = vmatpush1.msra.mxu0 0.0
        %428 = vmatprep.subr.mxu0 0.0
        %429 = vmatpush1.msra.mxu0 0.0
        %430 = vmatprep.subr.mxu0 0.0
        %431 = vmatpush1.msra.mxu0 0.0
        %432 = vmatprep.subr.mxu0 0.0
        %433 = vmatpush1.msra.mxu0 0.0
        %434 = vmatprep.subr.mxu0 0.0
        %435 = vmatpush1.msra.mxu0 0.0
        %436 = vmatprep.subr.mxu0 0.0
        %437 = vmatpush1.msra.mxu0 0.0
        %438 = vmatprep.subr.mxu0 0.0
        %439 = vmatpush1.msra.mxu0 0.0
        %440 = vmatprep.subr.mxu0 0.0
        %441 = vmatpush1.msra.mxu0 0.0
        %442 = vmatprep.subr.mxu0 0.0
        %443 = vmatpush1.msra.mxu0 0.0
        %444 = vmatprep.subr.mxu0 0.0
        %445 = vmatpush1.msra.mxu0 0.0
        %446 = vmatprep.subr.mxu0 0.0
        %447 = vmatpush1.msra.mxu0 0.0
        %448 = vmatprep.subr.mxu0 0.0
        %449 = vmatpush1.msra.mxu0 0.0
        %450 = vmatprep.subr.mxu0 0.0
        %451 = vmatpush1.msra.mxu0 0.0
        %452 = vmatprep.subr.mxu0 0.0
        %453 = vmatpush1.msra.mxu0 0.0
        %454 = vmatprep.subr.mxu0 0.0
        %455 = vmatpush1.msra.mxu0 0.0
        %456 = vmatprep.subr.mxu0 0.0
        %457 = vmatpush1.msra.mxu0 0.0
        %458 = vmatprep.mubr.f32.mxu0 0.0
        %459 = vmatmul.mubr.f32.gmra.mrb[0].mxu0 %v389
        %v460 = vpop.f32.mrb[0].mxu0
        %v461 = vadd.f32 0.0, %v460
        %v462 = vpop.f32.mrb[0].mxu0
        %463 = vmatprep.mubr.f32.mxu0 0.0
        %464 = vmatmul.mubr.f32.gmra.mrb[0].mxu0 %v392
        %v465 = vpop.f32.mrb[0].mxu0
        %v466 = vadd.f32 0.0, %v465
        %v467 = vpop.f32.mrb[0].mxu0
        %468 = vdwg.mxu0
        %469 = vxpose.xlu0.b32.start [1/16] %v461, 128
        %470 = vxpose.xlu0.b32.cont [2/16] %v466, 128
        %471 = vxpose.xlu0.b32.cont [3/16] 0.0, 128
        %472 = vxpose.xlu0.b32.cont [4/16] 0.0, 128
        %473 = vxpose.xlu0.b32.cont [5/16] 0.0, 128
        %474 = vxpose.xlu0.b32.cont [6/16] 0.0, 128
        %475 = vxpose.xlu0.b32.cont [7/16] 0.0, 128
        %476 = vxpose.xlu0.b32.cont [8/16] 0.0, 128
        %477 = vxpose.xlu0.b32.cont [9/16] 0.0, 128
        %478 = vxpose.xlu0.b32.cont [10/16] 0.0, 128
        %479 = vxpose.xlu0.b32.cont [11/16] 0.0, 128
        %480 = vxpose.xlu0.b32.cont [12/16] 0.0, 128
        %481 = vxpose.xlu0.b32.cont [13/16] 0.0, 128
        %482 = vxpose.xlu0.b32.cont [14/16] 0.0, 128
        %483 = vxpose.xlu0.b32.cont [15/16] 0.0, 128
        %484 = vxpose.xlu0.b32.end [16/16] 0.0, 128
        %v485 = vpop.trf.xlu0
        %v486 = vpop.trf.xlu0
        %v487 = vpop.trf.xlu0
        %v488 = vpop.trf.xlu0
        %v489 = vpop.trf.xlu0
        %v490 = vpop.trf.xlu0
        %v491 = vpop.trf.xlu0
        %v492 = vpop.trf.xlu0
        %v493 = vpop.trf.xlu0
        %v494 = vpop.trf.xlu0
        %v495 = vpop.trf.xlu0
        %v496 = vpop.trf.xlu0
        %v497 = vpop.trf.xlu0
        %v498 = vpop.trf.xlu0
        %v499 = vpop.trf.xlu0
        %v500 = vpop.trf.xlu0
        %vm501 = vcmask 130048
        %v503 = vsel %vm501, %v485, 0
        %v506 = vsel %vm501, %v486, 0
        %v509 = vsel %vm501, %v487, 0
        %v512 = vsel %vm501, %v488, 0
        %v515 = vsel %vm501, %v489, 0
        %v518 = vsel %vm501, %v490, 0
        %v521 = vsel %vm501, %v491, 0
        %v524 = vsel %vm501, %v492, 0
        %v527 = vsel %vm501, %v493, 0
        %v530 = vsel %vm501, %v494, 0
        %v533 = vsel %vm501, %v495, 0
        %v536 = vsel %vm501, %v496, 0
        %v539 = vsel %vm501, %v497, 0
        %v542 = vsel %vm501, %v498, 0
        %v545 = vsel %vm501, %v499, 0
        %v548 = vsel %vm501, %v500, 0
        %550 = vmatprep.subr.mxu0 0.0
        %551 = vmatpush1.msra.mxu0 %v461
        %552 = vmatprep.subr.mxu0 0.0
        %553 = vmatpush1.msra.mxu0 %v466
        %554 = vmatprep.subr.mxu0 0.0
        %555 = vmatpush1.msra.mxu0 0.0
        %556 = vmatprep.subr.mxu0 0.0
        %557 = vmatpush1.msra.mxu0 0.0
        %558 = vmatprep.subr.mxu0 0.0
        %559 = vmatpush1.msra.mxu0 0.0
        %560 = vmatprep.subr.mxu0 0.0
        %561 = vmatpush1.msra.mxu0 0.0
        %562 = vmatprep.subr.mxu0 0.0
        %563 = vmatpush1.msra.mxu0 0.0
        %564 = vmatprep.subr.mxu0 0.0
        %565 = vmatpush1.msra.mxu0 0.0
        %566 = vmatprep.subr.mxu0 0.0
        %567 = vmatpush1.msra.mxu0 0.0
        %568 = vmatprep.subr.mxu0 0.0
        %569 = vmatpush1.msra.mxu0 0.0
        %570 = vmatprep.subr.mxu0 0.0
        %571 = vmatpush1.msra.mxu0 0.0
        %572 = vmatprep.subr.mxu0 0.0
        %573 = vmatpush1.msra.mxu0 0.0
        %574 = vmatprep.subr.mxu0 0.0
        %575 = vmatpush1.msra.mxu0 0.0
        %576 = vmatprep.subr.mxu0 0.0
        %577 = vmatpush1.msra.mxu0 0.0
        %578 = vmatprep.subr.mxu0 0.0
        %579 = vmatpush1.msra.mxu0 0.0
        %580 = vmatprep.subr.mxu0 0.0
        %581 = vmatpush1.msra.mxu0 0.0
        %582 = vmatprep.subr.mxu0 0.0
        %583 = vmatpush1.msra.mxu0 0.0
        %584 = vmatprep.subr.mxu0 0.0
        %585 = vmatpush1.msra.mxu0 0.0
        %586 = vmatprep.subr.mxu0 0.0
        %587 = vmatpush1.msra.mxu0 0.0
        %588 = vmatprep.subr.mxu0 0.0
        %589 = vmatpush1.msra.mxu0 0.0
        %590 = vmatprep.subr.mxu0 0.0
        %591 = vmatpush1.msra.mxu0 0.0
        %592 = vmatprep.subr.mxu0 0.0
        %593 = vmatpush1.msra.mxu0 0.0
        %594 = vmatprep.subr.mxu0 0.0
        %595 = vmatpush1.msra.mxu0 0.0
        %596 = vmatprep.subr.mxu0 0.0
        %597 = vmatpush1.msra.mxu0 0.0
        %598 = vmatprep.subr.mxu0 0.0
        %599 = vmatpush1.msra.mxu0 0.0
        %600 = vmatprep.subr.mxu0 0.0
        %601 = vmatpush1.msra.mxu0 0.0
        %602 = vmatprep.subr.mxu0 0.0
        %603 = vmatpush1.msra.mxu0 0.0
        %604 = vmatprep.subr.mxu0 0.0
        %605 = vmatpush1.msra.mxu0 0.0
        %606 = vmatprep.subr.mxu0 0.0
        %607 = vmatpush1.msra.mxu0 0.0
        %608 = vmatprep.subr.mxu0 0.0
        %609 = vmatpush1.msra.mxu0 0.0
        %610 = vmatprep.subr.mxu0 0.0
        %611 = vmatpush1.msra.mxu0 0.0
        %612 = vmatprep.subr.mxu0 0.0
        %613 = vmatpush1.msra.mxu0 0.0
        %614 = vmatprep.mubr.f32.mxu0 0.0
        %615 = vmatmul.mubr.f32.gmra.mrb[0].mxu0 %v503
        %v616 = vpop.f32.mrb[0].mxu0
        %v617 = vadd.f32 %v369, %v616
        %v618 = vpop.f32.mrb[0].mxu0
        %619 = vmatprep.mubr.f32.mxu0 0.0
        %620 = vmatmul.mubr.f32.gmra.mrb[0].mxu0 %v506
        %v621 = vpop.f32.mrb[0].mxu0
        %v622 = vadd.f32 %v370, %v621
        %v623 = vpop.f32.mrb[0].mxu0
        %624 = vmatprep.mubr.f32.mxu0 0.0
        %625 = vmatmul.mubr.f32.gmra.mrb[0].mxu0 %v509
        %v626 = vpop.f32.mrb[0].mxu0
        %v627 = vadd.f32 %v371, %v626
        %v628 = vpop.f32.mrb[0].mxu0
        %629 = vmatprep.mubr.f32.mxu0 0.0
        %630 = vmatmul.mubr.f32.gmra.mrb[0].mxu0 %v512
        %v631 = vpop.f32.mrb[0].mxu0
        %v632 = vadd.f32 %v372, %v631
        %v633 = vpop.f32.mrb[0].mxu0
        %634 = vmatprep.mubr.f32.mxu0 0.0
        %635 = vmatmul.mubr.f32.gmra.mrb[0].mxu0 %v515
        %v636 = vpop.f32.mrb[0].mxu0
        %v637 = vadd.f32 %v373, %v636
        %v638 = vpop.f32.mrb[0].mxu0
        %639 = vmatprep.mubr.f32.mxu0 0.0
        %640 = vmatmul.mubr.f32.gmra.mrb[0].mxu0 %v518
        %v641 = vpop.f32.mrb[0].mxu0
        %v642 = vadd.f32 %v374, %v641
        %v643 = vpop.f32.mrb[0].mxu0
        %644 = vmatprep.mubr.f32.mxu0 0.0
        %645 = vmatmul.mubr.f32.gmra.mrb[0].mxu0 %v521
        %v646 = vpop.f32.mrb[0].mxu0
        %v647 = vadd.f32 %v375, %v646
        %v648 = vpop.f32.mrb[0].mxu0
        %649 = vmatprep.mubr.f32.mxu0 0.0
        %650 = vmatmul.mubr.f32.gmra.mrb[0].mxu0 %v524
        %v651 = vpop.f32.mrb[0].mxu0
        %v652 = vadd.f32 %v376, %v651
        %v653 = vpop.f32.mrb[0].mxu0
        %654 = vmatprep.mubr.f32.mxu0 0.0
        %655 = vmatmul.mubr.f32.gmra.mrb[0].mxu0 %v527
        %v656 = vpop.f32.mrb[0].mxu0
        %v657 = vadd.f32 %v377, %v656
        %v658 = vpop.f32.mrb[0].mxu0
        %659 = vmatprep.mubr.f32.mxu0 0.0
        %660 = vmatmul.mubr.f32.gmra.mrb[0].mxu0 %v530
        %v661 = vpop.f32.mrb[0].mxu0
        %v662 = vadd.f32 %v378, %v661
        %v663 = vpop.f32.mrb[0].mxu0
        %664 = vmatprep.mubr.f32.mxu0 0.0
        %665 = vmatmul.mubr.f32.gmra.mrb[0].mxu0 %v533
        %v666 = vpop.f32.mrb[0].mxu0
        %v667 = vadd.f32 %v379, %v666
        %v668 = vpop.f32.mrb[0].mxu0
        %669 = vmatprep.mubr.f32.mxu0 0.0
        %670 = vmatmul.mubr.f32.gmra.mrb[0].mxu0 %v536
        %v671 = vpop.f32.mrb[0].mxu0
        %v672 = vadd.f32 %v380, %v671
        %v673 = vpop.f32.mrb[0].mxu0
        %674 = vmatprep.mubr.f32.mxu0 0.0
        %675 = vmatmul.mubr.f32.gmra.mrb[0].mxu0 %v539
        %v676 = vpop.f32.mrb[0].mxu0
        %v677 = vadd.f32 %v381, %v676
        %v678 = vpop.f32.mrb[0].mxu0
        %679 = vmatprep.mubr.f32.mxu0 0.0
        %680 = vmatmul.mubr.f32.gmra.mrb[0].mxu0 %v542
        %v681 = vpop.f32.mrb[0].mxu0
        %v682 = vadd.f32 %v382, %v681
        %v683 = vpop.f32.mrb[0].mxu0
        %684 = vmatprep.mubr.f32.mxu0 0.0
        %685 = vmatmul.mubr.f32.gmra.mrb[0].mxu0 %v545
        %v686 = vpop.f32.mrb[0].mxu0
        %v687 = vadd.f32 %v383, %v686
        %v688 = vpop.f32.mrb[0].mxu0
        %689 = vmatprep.mubr.f32.mxu0 0.0
        %690 = vmatmul.mubr.f32.gmra.mrb[0].mxu0 %v548
        %v691 = vpop.f32.mrb[0].mxu0
        %v692 = vadd.f32 %v384, %v691
        %v693 = vpop.f32.mrb[0].mxu0
        %694 = vdwg.mxu0
        %695 = vmax.xlane.f32.xlu0 %v617
        %v696 = vpop.xlane.xlu0 %695
        %697 = vmax.xlane.f32.xlu0 %v622
        %v698 = vpop.xlane.xlu0 %697
        %699 = vmax.xlane.f32.xlu0 %v627
        %v700 = vpop.xlane.xlu0 %699
        %701 = vmax.xlane.f32.xlu0 %v632
        %v702 = vpop.xlane.xlu0 %701
        %703 = vmax.xlane.f32.xlu0 %v637
        %v704 = vpop.xlane.xlu0 %703
        %705 = vmax.xlane.f32.xlu0 %v642
        %v706 = vpop.xlane.xlu0 %705
        %707 = vmax.xlane.f32.xlu0 %v647
        %v708 = vpop.xlane.xlu0 %707
        %709 = vmax.xlane.f32.xlu0 %v652
        %v710 = vpop.xlane.xlu0 %709
        %711 = vmax.xlane.f32.xlu0 %v657
        %v712 = vpop.xlane.xlu0 %711
        %713 = vmax.xlane.f32.xlu0 %v662
        %v714 = vpop.xlane.xlu0 %713
        %715 = vmax.xlane.f32.xlu0 %v667
        %v716 = vpop.xlane.xlu0 %715
        %717 = vmax.xlane.f32.xlu0 %v672
        %v718 = vpop.xlane.xlu0 %717
        %719 = vmax.xlane.f32.xlu0 %v677
        %v720 = vpop.xlane.xlu0 %719
        %721 = vmax.xlane.f32.xlu0 %v682
        %v722 = vpop.xlane.xlu0 %721
        %723 = vmax.xlane.f32.xlu0 %v687
        %v724 = vpop.xlane.xlu0 %723
        %725 = vmax.xlane.f32.xlu0 %v692
        %v726 = vpop.xlane.xlu0 %725
        %v727 = vsub.f32 %v617, %v696
        %v728 = vsub.f32 %v622, %v698
        %v729 = vsub.f32 %v627, %v700
        %v730 = vsub.f32 %v632, %v702
        %v731 = vsub.f32 %v637, %v704
        %v732 = vsub.f32 %v642, %v706
        %v733 = vsub.f32 %v647, %v708
        %v734 = vsub.f32 %v652, %v710
        %v735 = vsub.f32 %v657, %v712
        %v736 = vsub.f32 %v662, %v714
        %v737 = vsub.f32 %v667, %v716
        %v738 = vsub.f32 %v672, %v718
        %v739 = vsub.f32 %v677, %v720
        %v740 = vsub.f32 %v682, %v722
        %v741 = vsub.f32 %v687, %v724
        %v742 = vsub.f32 %v692, %v726
        %v743 = vmul.f32 %v727, 1.442695
        %v744 = vpow.pop %v743
        %v745 = vmul.f32 %v728, 1.442695
        %v746 = vpow.pop %v745
        %v747 = vmul.f32 %v729, 1.442695
        %v748 = vpow.pop %v747
        %v749 = vmul.f32 %v730, 1.442695
        %v750 = vpow.pop %v749
        %v751 = vmul.f32 %v731, 1.442695
        %v752 = vpow.pop %v751
        %v753 = vmul.f32 %v732, 1.442695
        %v754 = vpow.pop %v753
        %v755 = vmul.f32 %v733, 1.442695
        %v756 = vpow.pop %v755
        %v757 = vmul.f32 %v734, 1.442695
        %v758 = vpow.pop %v757
        %v759 = vmul.f32 %v735, 1.442695
        %v760 = vpow.pop %v759
        %v761 = vmul.f32 %v736, 1.442695
        %v762 = vpow.pop %v761
        %v763 = vmul.f32 %v737, 1.442695
        %v764 = vpow.pop %v763
        %v765 = vmul.f32 %v738, 1.442695
        %v766 = vpow.pop %v765
        %v767 = vmul.f32 %v739, 1.442695
        %v768 = vpow.pop %v767
        %v769 = vmul.f32 %v740, 1.442695
        %v770 = vpow.pop %v769
        %v771 = vmul.f32 %v741, 1.442695
        %v772 = vpow.pop %v771
        %v773 = vmul.f32 %v742, 1.442695
        %v774 = vpow.pop %v773
        %775 = vadd.xlane.f32.xlu0 %v744
        %v776 = vpop.xlane.xlu0 %775
        %777 = vadd.xlane.f32.xlu0 %v746
        %v778 = vpop.xlane.xlu0 %777
        %779 = vadd.xlane.f32.xlu0 %v748
        %v780 = vpop.xlane.xlu0 %779
        %781 = vadd.xlane.f32.xlu0 %v750
        %v782 = vpop.xlane.xlu0 %781
        %783 = vadd.xlane.f32.xlu0 %v752
        %v784 = vpop.xlane.xlu0 %783
        %785 = vadd.xlane.f32.xlu0 %v754
        %v786 = vpop.xlane.xlu0 %785
        %787 = vadd.xlane.f32.xlu0 %v756
        %v788 = vpop.xlane.xlu0 %787
        %789 = vadd.xlane.f32.xlu0 %v758
        %v790 = vpop.xlane.xlu0 %789
        %791 = vadd.xlane.f32.xlu0 %v760
        %v792 = vpop.xlane.xlu0 %791
        %793 = vadd.xlane.f32.xlu0 %v762
        %v794 = vpop.xlane.xlu0 %793
        %795 = vadd.xlane.f32.xlu0 %v764
        %v796 = vpop.xlane.xlu0 %795
        %797 = vadd.xlane.f32.xlu0 %v766
        %v798 = vpop.xlane.xlu0 %797
        %799 = vadd.xlane.f32.xlu0 %v768
        %v800 = vpop.xlane.xlu0 %799
        %801 = vadd.xlane.f32.xlu0 %v770
        %v802 = vpop.xlane.xlu0 %801
        %803 = vadd.xlane.f32.xlu0 %v772
        %v804 = vpop.xlane.xlu0 %803
        %805 = vadd.xlane.f32.xlu0 %v774
        %v806 = vpop.xlane.xlu0 %805
        %v807 = vrcp.pop %v776
        %v808 = vmul.f32 1.0, %v807
        %v809 = vrcp.pop %v778
        %v810 = vmul.f32 1.0, %v809
        %v811 = vrcp.pop %v780
        %v812 = vmul.f32 1.0, %v811
        %v813 = vrcp.pop %v782
        %v814 = vmul.f32 1.0, %v813
        %v815 = vrcp.pop %v784
        %v816 = vmul.f32 1.0, %v815
        %v817 = vrcp.pop %v786
        %v818 = vmul.f32 1.0, %v817
        %v819 = vrcp.pop %v788
        %v820 = vmul.f32 1.0, %v819
        %v821 = vrcp.pop %v790
        %v822 = vmul.f32 1.0, %v821
        %v823 = vrcp.pop %v792
        %v824 = vmul.f32 1.0, %v823
        %v825 = vrcp.pop %v794
        %v826 = vmul.f32 1.0, %v825
        %v827 = vrcp.pop %v796
        %v828 = vmul.f32 1.0, %v827
        %v829 = vrcp.pop %v798
        %v830 = vmul.f32 1.0, %v829
        %v831 = vrcp.pop %v800
        %v832 = vmul.f32 1.0, %v831
        %v833 = vrcp.pop %v802
        %v834 = vmul.f32 1.0, %v833
        %v835 = vrcp.pop %v804
        %v836 = vmul.f32 1.0, %v835
        %v837 = vrcp.pop %v806
        %v838 = vmul.f32 1.0, %v837
        %v839 = vmul.f32 %v744, %v808
        %v840 = vmul.f32 %v746, %v810
        %v841 = vmul.f32 %v748, %v812
        %v842 = vmul.f32 %v750, %v814
        %v843 = vmul.f32 %v752, %v816
        %v844 = vmul.f32 %v754, %v818
        %v845 = vmul.f32 %v756, %v820
        %v846 = vmul.f32 %v758, %v822
        %v847 = vmul.f32 %v760, %v824
        %v848 = vmul.f32 %v762, %v826
        %v849 = vmul.f32 %v764, %v828
        %v850 = vmul.f32 %v766, %v830
        %v851 = vmul.f32 %v768, %v832
        %v852 = vmul.f32 %v770, %v834
        %v853 = vmul.f32 %v772, %v836
        %v854 = vmul.f32 %v774, %v838
        %v855 = vadd.f32 %v839, %v840
        %v856 = vadd.f32 %v855, %v841
        %v857 = vadd.f32 %v856, %v842
        %v858 = vadd.f32 %v857, %v843
        %v859 = vadd.f32 %v858, %v844
        %v860 = vadd.f32 %v859, %v845
        %v861 = vadd.f32 %v860, %v846
        %v862 = vadd.f32 %v861, %v847
        %v863 = vadd.f32 %v862, %v848
        %v864 = vadd.f32 %v863, %v849
        %v865 = vadd.f32 %v864, %v850
        %v866 = vadd.f32 %v865, %v851
        %v867 = vadd.f32 %v866, %v852
        %v868 = vadd.f32 %v867, %v853
        %v869 = vadd.f32 %v868, %v854
        %v870 = vrot.slane %v869, 4
        %v871 = vadd.f32 %v869, %v870
        %v872 = vrot.slane %v871, 2
        %v873 = vadd.f32 %v871, %v872
        %v874 = vrot.slane %v873, 1
        %v875 = vadd.f32 %v873, %v874
        %v876 = vadd.f32 %v875, 1e-09
        %v877 = vrcp.pop %v876
        %v878 = vmul.f32 1.0, %v877
        %v879 = vmul.f32 %v839, %v878
        %v880 = vmul.f32 %v840, %v878
        %v881 = vmul.f32 %v841, %v878
        %v882 = vmul.f32 %v842, %v878
        %v883 = vmul.f32 %v843, %v878
        %v884 = vmul.f32 %v844, %v878
        %v885 = vmul.f32 %v845, %v878
        %v886 = vmul.f32 %v846, %v878
        %v887 = vmul.f32 %v847, %v878
        %v888 = vmul.f32 %v848, %v878
        %v889 = vmul.f32 %v849, %v878
        %v890 = vmul.f32 %v850, %v878
        %v891 = vmul.f32 %v851, %v878
        %v892 = vmul.f32 %v852, %v878
        %v893 = vmul.f32 %v853, %v878
        %v894 = vmul.f32 %v854, %v878
        %v895 = vld [vmem:[#allocation7] sm:$0xff]
        %v896 = vld [vmem:[#allocation7 + $0x8] sm:$0xff]
        %v897 = vld [vmem:[#allocation7 + $0x10] sm:$0xff]
        %v898 = vld [vmem:[#allocation7 + $0x18] sm:$0xff]
        %v899 = vld [vmem:[#allocation7 + $0x20] sm:$0xff]
        %v900 = vld [vmem:[#allocation7 + $0x28] sm:$0xff]
        %v901 = vld [vmem:[#allocation7 + $0x30] sm:$0xff]
        %v902 = vld [vmem:[#allocation7 + $0x38] sm:$0xff]
        %v903 = vld [vmem:[%s4] sm:$0xff]
        %v904 = vld [vmem:[%s4 + $0x8] sm:$0xff]
        %v905 = vld [vmem:[%s4 + $0x10] sm:$0xff]
        %v906 = vld [vmem:[%s4 + $0x18] sm:$0xff]
        %v907 = vld [vmem:[%s4 + $0x20] sm:$0xff]
        %v908 = vld [vmem:[%s4 + $0x28] sm:$0xff]
        %v909 = vld [vmem:[%s4 + $0x30] sm:$0xff]
        %v910 = vld [vmem:[%s4 + $0x38] sm:$0xff]
        %912 = vset.pattern.permute.xlu0 0
        %913 = vperm.xlu0 %912, %v903
        %v914 = vpop.permute.xlu0 %913
        %917 = vset.pattern.permute.xlu0 0
        %918 = vperm.xlu0 %917, %v904
        %v919 = vpop.permute.xlu0 %918
        %922 = vset.pattern.permute.xlu0 0
        %923 = vperm.xlu0 %922, %v905
        %v924 = vpop.permute.xlu0 %923
        %927 = vset.pattern.permute.xlu0 0
        %928 = vperm.xlu0 %927, %v906
        %v929 = vpop.permute.xlu0 %928
        %932 = vset.pattern.permute.xlu0 0
        %933 = vperm.xlu0 %932, %v907
        %v934 = vpop.permute.xlu0 %933
        %937 = vset.pattern.permute.xlu0 0
        %938 = vperm.xlu0 %937, %v908
        %v939 = vpop.permute.xlu0 %938
        %942 = vset.pattern.permute.xlu0 0
        %943 = vperm.xlu0 %942, %v909
        %v944 = vpop.permute.xlu0 %943
        %947 = vset.pattern.permute.xlu0 0
        %948 = vperm.xlu0 %947, %v910
        %v949 = vpop.permute.xlu0 %948
        %v952 = vsel %vm387, %v895, 0
        %v955 = vsel %vm387, %v896, 0
        %v958 = vsel %vm387, %v897, 0
        %v961 = vsel %vm387, %v898, 0
        %v964 = vsel %vm387, %v899, 0
        %v967 = vsel %vm387, %v900, 0
        %v970 = vsel %vm387, %v901, 0
        %v973 = vsel %vm387, %v902, 0
        %975 = vmatprep.subr.mxu0 0.0
        %976 = vmatpush1.msra.mxu0 %v361
        %977 = vmatprep.subr.mxu0 0.0
        %978 = vmatpush1.msra.mxu0 %v362
        %979 = vmatprep.subr.mxu0 0.0
        %980 = vmatpush1.msra.mxu0 %v363
        %981 = vmatprep.subr.mxu0 0.0
        %982 = vmatpush1.msra.mxu0 %v364
        %983 = vmatprep.subr.mxu0 0.0
        %984 = vmatpush1.msra.mxu0 %v365
        %985 = vmatprep.subr.mxu0 0.0
        %986 = vmatpush1.msra.mxu0 %v366
        %987 = vmatprep.subr.mxu0 0.0
        %988 = vmatpush1.msra.mxu0 %v367
        %989 = vmatprep.subr.mxu0 0.0
        %990 = vmatpush1.msra.mxu0 %v368
        %991 = vmatprep.subr.mxu0 0.0
        %992 = vmatpush1.msra.mxu0 0.0
        %993 = vmatprep.subr.mxu0 0.0
        %994 = vmatpush1.msra.mxu0 0.0
        %995 = vmatprep.subr.mxu0 0.0
        %996 = vmatpush1.msra.mxu0 0.0
        %997 = vmatprep.subr.mxu0 0.0
        %998 = vmatpush1.msra.mxu0 0.0
        %999 = vmatprep.subr.mxu0 0.0
        %1000 = vmatpush1.msra.mxu0 0.0
        %1001 = vmatprep.subr.mxu0 0.0
        %1002 = vmatpush1.msra.mxu0 0.0
        %1003 = vmatprep.subr.mxu0 0.0
        %1004 = vmatpush1.msra.mxu0 0.0
        %1005 = vmatprep.subr.mxu0 0.0
        %1006 = vmatpush1.msra.mxu0 0.0
        %1007 = vmatprep.subr.mxu0 0.0
        %1008 = vmatpush1.msra.mxu0 0.0
        %1009 = vmatprep.subr.mxu0 0.0
        %1010 = vmatpush1.msra.mxu0 0.0
        %1011 = vmatprep.subr.mxu0 0.0
        %1012 = vmatpush1.msra.mxu0 0.0
        %1013 = vmatprep.subr.mxu0 0.0
        %1014 = vmatpush1.msra.mxu0 0.0
        %1015 = vmatprep.subr.mxu0 0.0
        %1016 = vmatpush1.msra.mxu0 0.0
        %1017 = vmatprep.subr.mxu0 0.0
        %1018 = vmatpush1.msra.mxu0 0.0
        %1019 = vmatprep.subr.mxu0 0.0
        %1020 = vmatpush1.msra.mxu0 0.0
        %1021 = vmatprep.subr.mxu0 0.0
        %1022 = vmatpush1.msra.mxu0 0.0
        %1023 = vmatprep.subr.mxu0 0.0
        %1024 = vmatpush1.msra.mxu0 0.0
        %1025 = vmatprep.subr.mxu0 0.0
        %1026 = vmatpush1.msra.mxu0 0.0
        %1027 = vmatprep.subr.mxu0 0.0
        %1028 = vmatpush1.msra.mxu0 0.0
        %1029 = vmatprep.subr.mxu0 0.0
        %1030 = vmatpush1.msra.mxu0 0.0
        %1031 = vmatprep.subr.mxu0 0.0
        %1032 = vmatpush1.msra.mxu0 0.0
        %1033 = vmatprep.subr.mxu0 0.0
        %1034 = vmatpush1.msra.mxu0 0.0
        %1035 = vmatprep.subr.mxu0 0.0
        %1036 = vmatpush1.msra.mxu0 0.0
        %1037 = vmatprep.subr.mxu0 0.0
        %1038 = vmatpush1.msra.mxu0 0.0
        %1039 = vmatprep.mubr.f32.mxu0 0.0
        %1040 = vmatmul.mubr.f32.gmra.mrb[0].mxu0 %v952
        %v1041 = vpop.f32.mrb[0].mxu0
        %v1042 = vadd.f32 %v914, %v1041
        %v1043 = vpop.f32.mrb[0].mxu0
        %1044 = vmatprep.mubr.f32.mxu0 0.0
        %1045 = vmatmul.mubr.f32.gmra.mrb[0].mxu0 %v955
        %v1046 = vpop.f32.mrb[0].mxu0
        %v1047 = vadd.f32 %v919, %v1046
        %v1048 = vpop.f32.mrb[0].mxu0
        %1049 = vmatprep.mubr.f32.mxu0 0.0
        %1050 = vmatmul.mubr.f32.gmra.mrb[0].mxu0 %v958
        %v1051 = vpop.f32.mrb[0].mxu0
        %v1052 = vadd.f32 %v924, %v1051
        %v1053 = vpop.f32.mrb[0].mxu0
        %1054 = vmatprep.mubr.f32.mxu0 0.0
        %1055 = vmatmul.mubr.f32.gmra.mrb[0].mxu0 %v961
        %v1056 = vpop.f32.mrb[0].mxu0
        %v1057 = vadd.f32 %v929, %v1056
        %v1058 = vpop.f32.mrb[0].mxu0
        %1059 = vmatprep.mubr.f32.mxu0 0.0
        %1060 = vmatmul.mubr.f32.gmra.mrb[0].mxu0 %v964
        %v1061 = vpop.f32.mrb[0].mxu0
        %v1062 = vadd.f32 %v934, %v1061
        %v1063 = vpop.f32.mrb[0].mxu0
        %1064 = vmatprep.mubr.f32.mxu0 0.0
        %1065 = vmatmul.mubr.f32.gmra.mrb[0].mxu0 %v967
        %v1066 = vpop.f32.mrb[0].mxu0
        %v1067 = vadd.f32 %v939, %v1066
        %v1068 = vpop.f32.mrb[0].mxu0
        %1069 = vmatprep.mubr.f32.mxu0 0.0
        %1070 = vmatmul.mubr.f32.gmra.mrb[0].mxu0 %v970
        %v1071 = vpop.f32.mrb[0].mxu0
        %v1072 = vadd.f32 %v944, %v1071
        %v1073 = vpop.f32.mrb[0].mxu0
        %1074 = vmatprep.mubr.f32.mxu0 0.0
        %1075 = vmatmul.mubr.f32.gmra.mrb[0].mxu0 %v973
        %v1076 = vpop.f32.mrb[0].mxu0
        %v1077 = vadd.f32 %v949, %v1076
        %v1078 = vpop.f32.mrb[0].mxu0
        %1079 = vdwg.mxu0
        %1080 = vmatprep.subr.mxu0 0.0
        %1081 = vmatpush1.msra.mxu0 %v879
        %1082 = vmatprep.subr.mxu0 0.0
        %1083 = vmatpush1.msra.mxu0 %v880
        %1084 = vmatprep.subr.mxu0 0.0
        %1085 = vmatpush1.msra.mxu0 %v881
        %1086 = vmatprep.subr.mxu0 0.0
        %1087 = vmatpush1.msra.mxu0 %v882
        %1088 = vmatprep.subr.mxu0 0.0
        %1089 = vmatpush1.msra.mxu0 %v883
        %1090 = vmatprep.subr.mxu0 0.0
        %1091 = vmatpush1.msra.mxu0 %v884
        %1092 = vmatprep.subr.mxu0 0.0
        %1093 = vmatpush1.msra.mxu0 %v885
        %1094 = vmatprep.subr.mxu0 0.0
        %1095 = vmatpush1.msra.mxu0 %v886
        %1096 = vmatprep.subr.mxu0 0.0
        %1097 = vmatpush1.msra.mxu0 %v887
        %1098 = vmatprep.subr.mxu0 0.0
        %1099 = vmatpush1.msra.mxu0 %v888
        %1100 = vmatprep.subr.mxu0 0.0
        %1101 = vmatpush1.msra.mxu0 %v889
        %1102 = vmatprep.subr.mxu0 0.0
        %1103 = vmatpush1.msra.mxu0 %v890
        %1104 = vmatprep.subr.mxu0 0.0
        %1105 = vmatpush1.msra.mxu0 %v891
        %1106 = vmatprep.subr.mxu0 0.0
        %1107 = vmatpush1.msra.mxu0 %v892
        %1108 = vmatprep.subr.mxu0 0.0
        %1109 = vmatpush1.msra.mxu0 %v893
        %1110 = vmatprep.subr.mxu0 0.0
        %1111 = vmatpush1.msra.mxu0 %v894
        %1112 = vmatprep.subr.mxu0 0.0
        %1113 = vmatpush1.msra.mxu0 0.0
        %1114 = vmatprep.subr.mxu0 0.0
        %1115 = vmatpush1.msra.mxu0 0.0
        %1116 = vmatprep.subr.mxu0 0.0
        %1117 = vmatpush1.msra.mxu0 0.0
        %1118 = vmatprep.subr.mxu0 0.0
        %1119 = vmatpush1.msra.mxu0 0.0
        %1120 = vmatprep.subr.mxu0 0.0
        %1121 = vmatpush1.msra.mxu0 0.0
        %1122 = vmatprep.subr.mxu0 0.0
        %1123 = vmatpush1.msra.mxu0 0.0
        %1124 = vmatprep.subr.mxu0 0.0
        %1125 = vmatpush1.msra.mxu0 0.0
        %1126 = vmatprep.subr.mxu0 0.0
        %1127 = vmatpush1.msra.mxu0 0.0
        %1128 = vmatprep.subr.mxu0 0.0
        %1129 = vmatpush1.msra.mxu0 0.0
        %1130 = vmatprep.subr.mxu0 0.0
        %1131 = vmatpush1.msra.mxu0 0.0
        %1132 = vmatprep.subr.mxu0 0.0
        %1133 = vmatpush1.msra.mxu0 0.0
        %1134 = vmatprep.subr.mxu0 0.0
        %1135 = vmatpush1.msra.mxu0 0.0
        %1136 = vmatprep.subr.mxu0 0.0
        %1137 = vmatpush1.msra.mxu0 0.0
        %1138 = vmatprep.subr.mxu0 0.0
        %1139 = vmatpush1.msra.mxu0 0.0
        %1140 = vmatprep.subr.mxu0 0.0
        %1141 = vmatpush1.msra.mxu0 0.0
        %1142 = vmatprep.subr.mxu0 0.0
        %1143 = vmatpush1.msra.mxu0 0.0
        %1144 = vmatprep.mubr.f32.mxu0 0.0
        %1145 = vmatmul.mubr.f32.gmra.mrb[0].mxu0 %v1042
        %v1146 = vpop.f32.mrb[0].mxu0
        %v1147 = vadd.f32 0.0, %v1146
        %v1148 = vpop.f32.mrb[0].mxu0
        %1149 = vmatprep.mubr.f32.mxu0 0.0
        %1150 = vmatmul.mubr.f32.gmra.mrb[0].mxu0 %v1047
        %v1151 = vpop.f32.mrb[0].mxu0
        %v1152 = vadd.f32 0.0, %v1151
        %v1153 = vpop.f32.mrb[0].mxu0
        %1154 = vmatprep.mubr.f32.mxu0 0.0
        %1155 = vmatmul.mubr.f32.gmra.mrb[0].mxu0 %v1052
        %v1156 = vpop.f32.mrb[0].mxu0
        %v1157 = vadd.f32 0.0, %v1156
        %v1158 = vpop.f32.mrb[0].mxu0
        %1159 = vmatprep.mubr.f32.mxu0 0.0
        %1160 = vmatmul.mubr.f32.gmra.mrb[0].mxu0 %v1057
        %v1161 = vpop.f32.mrb[0].mxu0
        %v1162 = vadd.f32 0.0, %v1161
        %v1163 = vpop.f32.mrb[0].mxu0
        %1164 = vmatprep.mubr.f32.mxu0 0.0
        %1165 = vmatmul.mubr.f32.gmra.mrb[0].mxu0 %v1062
        %v1166 = vpop.f32.mrb[0].mxu0
        %v1167 = vadd.f32 0.0, %v1166
        %v1168 = vpop.f32.mrb[0].mxu0
        %1169 = vmatprep.mubr.f32.mxu0 0.0
        %1170 = vmatmul.mubr.f32.gmra.mrb[0].mxu0 %v1067
        %v1171 = vpop.f32.mrb[0].mxu0
        %v1172 = vadd.f32 0.0, %v1171
        %v1173 = vpop.f32.mrb[0].mxu0
        %1174 = vmatprep.mubr.f32.mxu0 0.0
        %1175 = vmatmul.mubr.f32.gmra.mrb[0].mxu0 %v1072
        %v1176 = vpop.f32.mrb[0].mxu0
        %v1177 = vadd.f32 0.0, %v1176
        %v1178 = vpop.f32.mrb[0].mxu0
        %1179 = vmatprep.mubr.f32.mxu0 0.0
        %1180 = vmatmul.mubr.f32.gmra.mrb[0].mxu0 %v1077
        %v1181 = vpop.f32.mrb[0].mxu0
        %v1182 = vadd.f32 0.0, %v1181
        %v1183 = vpop.f32.mrb[0].mxu0
        %1184 = vdwg.mxu0
        %v1185 = vsub.f32 %v361, %v1147
        %v1186 = vsub.f32 %v362, %v1152
        %v1187 = vsub.f32 %v363, %v1157
        %v1188 = vsub.f32 %v364, %v1162
        %v1189 = vsub.f32 %v365, %v1167
        %v1190 = vsub.f32 %v366, %v1172
        %v1191 = vsub.f32 %v367, %v1177
        %v1192 = vsub.f32 %v368, %v1182
        %v1193 = vld [vmem:[#allocation8] sm:$0xff]
        %v1194 = vld [vmem:[#allocation8 + $0x8] sm:$0xff]
        %v1195 = vld [vmem:[#allocation8 + $0x10] sm:$0xff]
        %v1196 = vld [vmem:[#allocation8 + $0x18] sm:$0xff]
        %v1197 = vld [vmem:[#allocation8 + $0x20] sm:$0xff]
        %v1198 = vld [vmem:[#allocation8 + $0x28] sm:$0xff]
        %v1199 = vld [vmem:[#allocation8 + $0x30] sm:$0xff]
        %v1200 = vld [vmem:[#allocation8 + $0x38] sm:$0xff]
        %v1201 = vld [vmem:[%s6] sm:$0xff]
        %v1202 = vld [vmem:[%s6 + $0x8] sm:$0xff]
        %v1203 = vld [vmem:[%s6 + $0x10] sm:$0xff]
        %v1204 = vld [vmem:[%s6 + $0x18] sm:$0xff]
        %v1205 = vld [vmem:[%s6 + $0x20] sm:$0xff]
        %v1206 = vld [vmem:[%s6 + $0x28] sm:$0xff]
        %v1207 = vld [vmem:[%s6 + $0x30] sm:$0xff]
        %v1208 = vld [vmem:[%s6 + $0x38] sm:$0xff]
        %1210 = vset.pattern.permute.xlu0 0
        %1211 = vperm.xlu0 %1210, %v1201
        %v1212 = vpop.permute.xlu0 %1211
        %1215 = vset.pattern.permute.xlu0 0
        %1216 = vperm.xlu0 %1215, %v1202
        %v1217 = vpop.permute.xlu0 %1216
        %1220 = vset.pattern.permute.xlu0 0
        %1221 = vperm.xlu0 %1220, %v1203
        %v1222 = vpop.permute.xlu0 %1221
        %1225 = vset.pattern.permute.xlu0 0
        %1226 = vperm.xlu0 %1225, %v1204
        %v1227 = vpop.permute.xlu0 %1226
        %1230 = vset.pattern.permute.xlu0 0
        %1231 = vperm.xlu0 %1230, %v1205
        %v1232 = vpop.permute.xlu0 %1231
        %1235 = vset.pattern.permute.xlu0 0
        %1236 = vperm.xlu0 %1235, %v1206
        %v1237 = vpop.permute.xlu0 %1236
        %1240 = vset.pattern.permute.xlu0 0
        %1241 = vperm.xlu0 %1240, %v1207
        %v1242 = vpop.permute.xlu0 %1241
        %1245 = vset.pattern.permute.xlu0 0
        %1246 = vperm.xlu0 %1245, %v1208
        %v1247 = vpop.permute.xlu0 %1246
        %v1250 = vsel %vm387, %v1193, 0
        %v1253 = vsel %vm387, %v1194, 0
        %v1256 = vsel %vm387, %v1195, 0
        %v1259 = vsel %vm387, %v1196, 0
        %v1262 = vsel %vm387, %v1197, 0
        %v1265 = vsel %vm387, %v1198, 0
        %v1268 = vsel %vm387, %v1199, 0
        %v1271 = vsel %vm387, %v1200, 0
        %1273 = vmatprep.subr.mxu0 0.0
        %1274 = vmatpush1.msra.mxu0 %v1185
        %1275 = vmatprep.subr.mxu0 0.0
        %1276 = vmatpush1.msra.mxu0 %v1186
        %1277 = vmatprep.subr.mxu0 0.0
        %1278 = vmatpush1.msra.mxu0 %v1187
        %1279 = vmatprep.subr.mxu0 0.0
        %1280 = vmatpush1.msra.mxu0 %v1188
        %1281 = vmatprep.subr.mxu0 0.0
        %1282 = vmatpush1.msra.mxu0 %v1189
        %1283 = vmatprep.subr.mxu0 0.0
        %1284 = vmatpush1.msra.mxu0 %v1190
        %1285 = vmatprep.subr.mxu0 0.0
        %1286 = vmatpush1.msra.mxu0 %v1191
        %1287 = vmatprep.subr.mxu0 0.0
        %1288 = vmatpush1.msra.mxu0 %v1192
        %1289 = vmatprep.subr.mxu0 0.0
        %1290 = vmatpush1.msra.mxu0 0.0
        %1291 = vmatprep.subr.mxu0 0.0
        %1292 = vmatpush1.msra.mxu0 0.0
        %1293 = vmatprep.subr.mxu0 0.0
        %1294 = vmatpush1.msra.mxu0 0.0
        %1295 = vmatprep.subr.mxu0 0.0
        %1296 = vmatpush1.msra.mxu0 0.0
        %1297 = vmatprep.subr.mxu0 0.0
        %1298 = vmatpush1.msra.mxu0 0.0
        %1299 = vmatprep.subr.mxu0 0.0
        %1300 = vmatpush1.msra.mxu0 0.0
        %1301 = vmatprep.subr.mxu0 0.0
        %1302 = vmatpush1.msra.mxu0 0.0
        %1303 = vmatprep.subr.mxu0 0.0
        %1304 = vmatpush1.msra.mxu0 0.0
        %1305 = vmatprep.subr.mxu0 0.0
        %1306 = vmatpush1.msra.mxu0 0.0
        %1307 = vmatprep.subr.mxu0 0.0
        %1308 = vmatpush1.msra.mxu0 0.0
        %1309 = vmatprep.subr.mxu0 0.0
        %1310 = vmatpush1.msra.mxu0 0.0
        %1311 = vmatprep.subr.mxu0 0.0
        %1312 = vmatpush1.msra.mxu0 0.0
        %1313 = vmatprep.subr.mxu0 0.0
        %1314 = vmatpush1.msra.mxu0 0.0
        %1315 = vmatprep.subr.mxu0 0.0
        %1316 = vmatpush1.msra.mxu0 0.0
        %1317 = vmatprep.subr.mxu0 0.0
        %1318 = vmatpush1.msra.mxu0 0.0
        %1319 = vmatprep.subr.mxu0 0.0
        %1320 = vmatpush1.msra.mxu0 0.0
        %1321 = vmatprep.subr.mxu0 0.0
        %1322 = vmatpush1.msra.mxu0 0.0
        %1323 = vmatprep.subr.mxu0 0.0
        %1324 = vmatpush1.msra.mxu0 0.0
        %1325 = vmatprep.subr.mxu0 0.0
        %1326 = vmatpush1.msra.mxu0 0.0
        %1327 = vmatprep.subr.mxu0 0.0
        %1328 = vmatpush1.msra.mxu0 0.0
        %1329 = vmatprep.subr.mxu0 0.0
        %1330 = vmatpush1.msra.mxu0 0.0
        %1331 = vmatprep.subr.mxu0 0.0
        %1332 = vmatpush1.msra.mxu0 0.0
        %1333 = vmatprep.subr.mxu0 0.0
        %1334 = vmatpush1.msra.mxu0 0.0
        %1335 = vmatprep.subr.mxu0 0.0
        %1336 = vmatpush1.msra.mxu0 0.0
        %1337 = vmatprep.mubr.f32.mxu0 0.0
        %1338 = vmatmul.mubr.f32.gmra.mrb[0].mxu0 %v1250
        %v1339 = vpop.f32.mrb[0].mxu0
        %v1340 = vadd.f32 %v1212, %v1339
        %v1341 = vpop.f32.mrb[0].mxu0
        %1342 = vmatprep.mubr.f32.mxu0 0.0
        %1343 = vmatmul.mubr.f32.gmra.mrb[0].mxu0 %v1253
        %v1344 = vpop.f32.mrb[0].mxu0
        %v1345 = vadd.f32 %v1217, %v1344
        %v1346 = vpop.f32.mrb[0].mxu0
        %1347 = vmatprep.mubr.f32.mxu0 0.0
        %1348 = vmatmul.mubr.f32.gmra.mrb[0].mxu0 %v1256
        %v1349 = vpop.f32.mrb[0].mxu0
        %v1350 = vadd.f32 %v1222, %v1349
        %v1351 = vpop.f32.mrb[0].mxu0
        %1352 = vmatprep.mubr.f32.mxu0 0.0
        %1353 = vmatmul.mubr.f32.gmra.mrb[0].mxu0 %v1259
        %v1354 = vpop.f32.mrb[0].mxu0
        %v1355 = vadd.f32 %v1227, %v1354
        %v1356 = vpop.f32.mrb[0].mxu0
        %1357 = vmatprep.mubr.f32.mxu0 0.0
        %1358 = vmatmul.mubr.f32.gmra.mrb[0].mxu0 %v1262
        %v1359 = vpop.f32.mrb[0].mxu0
        %v1360 = vadd.f32 %v1232, %v1359
        %v1361 = vpop.f32.mrb[0].mxu0
        %1362 = vmatprep.mubr.f32.mxu0 0.0
        %1363 = vmatmul.mubr.f32.gmra.mrb[0].mxu0 %v1265
        %v1364 = vpop.f32.mrb[0].mxu0
        %v1365 = vadd.f32 %v1237, %v1364
        %v1366 = vpop.f32.mrb[0].mxu0
        %1367 = vmatprep.mubr.f32.mxu0 0.0
        %1368 = vmatmul.mubr.f32.gmra.mrb[0].mxu0 %v1268
        %v1369 = vpop.f32.mrb[0].mxu0
        %v1370 = vadd.f32 %v1242, %v1369
        %v1371 = vpop.f32.mrb[0].mxu0
        %1372 = vmatprep.mubr.f32.mxu0 0.0
        %1373 = vmatmul.mubr.f32.gmra.mrb[0].mxu0 %v1271
        %v1374 = vpop.f32.mrb[0].mxu0
        %v1375 = vadd.f32 %v1247, %v1374
        %v1376 = vpop.f32.mrb[0].mxu0
        %1377 = vdwg.mxu0
        %v1378 = vmax.f32 %v1340, 0.0
        %v1379 = vmax.f32 %v1345, 0.0
        %v1380 = vmax.f32 %v1350, 0.0
        %v1381 = vmax.f32 %v1355, 0.0
        %v1382 = vmax.f32 %v1360, 0.0
        %v1383 = vmax.f32 %v1365, 0.0
        %v1384 = vmax.f32 %v1370, 0.0
        %v1385 = vmax.f32 %v1375, 0.0
        %v1386 = vadd.f32 %v361, %v1378
        %v1387 = vadd.f32 %v362, %v1379
        %v1388 = vadd.f32 %v363, %v1380
        %v1389 = vadd.f32 %v364, %v1381
        %v1390 = vadd.f32 %v365, %v1382
        %v1391 = vadd.f32 %v366, %v1383
        %v1392 = vadd.f32 %v367, %v1384
        %v1393 = vadd.f32 %v368, %v1385
        %1394 = vst [vmem:[%s355] sm:$0xff] %v1386
        %1395 = vst [vmem:[%s355 + $0x8] sm:$0xff] %v1387
        %1396 = vst [vmem:[%s355 + $0x10] sm:$0xff] %v1388
        %1397 = vst [vmem:[%s355 + $0x18] sm:$0xff] %v1389
        %1398 = vst [vmem:[%s355 + $0x20] sm:$0xff] %v1390
        %1399 = vst [vmem:[%s355 + $0x28] sm:$0xff] %v1391
        %1400 = vst [vmem:[%s355 + $0x30] sm:$0xff] %v1392
        %1401 = vst [vmem:[%s355 + $0x38] sm:$0xff] %v1393
        %s1402 = sand.u32 %s191, 1
        %s1403 = scalar_lea.sflag [#allocation4], %s1402
        %s1404 = sand.u32 %s191, 1
        %s1405 = smul.addr %s1404, 64
        %s1406 = scalar_lea.vmem [#allocation10], %s1405
        // Predicated region
        $region65: #{tpu_custom_call.1} parent=47 // pred_check
          %p1407 = pneg %p201
        $region66: #{tpu_custom_call.1} parent=47 // pred_check_branch
          %1409 = sbr.rel (%p1407) target = $region68
        $region67: #{tpu_custom_call.1} parent=47 // pred_region
          %s1411 = ssub.s32 1024, 1024
          %1412 = vsyncadd %s1403, %s1411
          %s1413 = smul.addr %s26, 8
          %s1414 = smul.addr %s1413, 128
          %s1415 = scalar_lea.hbm %s7, %s1414
          %s1416 = sshll.u32 %s1406, 4
          %s1417 = int_to_ptr.vmem [resolvable:$true] %s1416
          %1422 = dma.vmem_to_hbm [thread:$0]  %s1417, 1024, %s1415, %s1403, 128, 128, 8
        $region68: #{tpu_custom_call.1} parent=47 // pred_fallthru
          _
      $region48: #{tpu_custom_call.1} parent=5 // pred_fallthru
        _
      %p1423 = scmp.le.s32.totalorder 2, %s21
      // Predicated region
      $region69: #{tpu_custom_call.1} parent=5 // pred_check
        %p1424 = pneg %p1423
      $region70: #{tpu_custom_call.1} parent=5 // pred_check_branch
        %1426 = sbr.rel (%p1424) target = $region72
      $region71: #{tpu_custom_call.1} parent=5 // pred_region
        %s1427 = ssub.s32 %s21, 2
        // Predicated region
        $region73: #{tpu_custom_call.1} parent=71 // pred_check
          %p1428 = pneg %p207
        $region74: #{tpu_custom_call.1} parent=71 // pred_check_branch
          %1430 = sbr.rel (%p1428) target = $region76
        $region75: #{tpu_custom_call.1} parent=71 // pred_region
          %s1431 = sand.u32 %s192, 1
          %s1432 = scalar_lea.sflag [#allocation4], %s1431
          %s1433 = sand.u32 %s192, 1
          %s1434 = smul.addr %s1433, 64
          %s1435 = scalar_lea.vmem [#allocation10], %s1434
          %1436 = dma.done %s1432, 1024
        $region76: #{tpu_custom_call.1} parent=71 // pred_fallthru
          _
      $region72: #{tpu_custom_call.1} parent=5 // pred_fallthru
        _
    $region6: #{tpu_custom_call.1} parent=1 // loop_footer
      %s25 = sadd.s32 1, %s21
    $region7: #{tpu_custom_call.1} parent=1 // loop_footer_branch
      %20 = sbr.rel target = $region3
    $region8: #{tpu_custom_call.1} parent=1 // loop_exit
      _
    %1437 = vsyncpa [#allocation3], 1
    %s1438 = scalar_lea.sflag [#allocation3], 1
    %1439 = vsyncpa %s1438, 1
    %1440 = vsyncpa [#allocation6], 1
    %1441 = vsyncpa [#allocation9], 1
    %1442 = vsyncpa [#allocation4], 1
    %s1443 = scalar_lea.sflag [#allocation4], 1
    %1444 = vsyncpa %s1443, 1

</llo_original>
